<compile_context>
chip_gen: v7x
topology: tpu7x:2x2x1
jax: 0.10.0
libtpu: 0.0.40
codegen_flags: <defaults>
</compile_context>

<pallas_src>
import jax
import jax.numpy as jnp
from jax.experimental import pallas as pl
from jax.experimental.pallas import tpu as pltpu

LEAKY_SLOPE = 0.01  # torch.nn.LeakyReLU default negative_slope


def _net_kernel(w1t_ref, b1_ref, w2t_ref, b2_ref, w3t_ref, b3_ref,
                x_ref, z_out_ref, logdet_out_ref):
    """Feature-major kernel. Shapes (per grid step):
       x_ref      : [D, TB]      activations, batch on lanes
       w1t_ref    : [N, H, D]    mask-folded, transposed
       w2t_ref    : [N, H, H]
       w3t_ref    : [N, 2D, H]   (1-mask)-folded, transposed (s head then t head)
       b*_ref     : [N, *, 1]    column-vector biases
       z_out_ref  : [D, TB]
       logdet_out : [1, TB]
    """
    z = x_ref[...].astype(jnp.float32)              # [D, TB]
    D, TB = z.shape
    N = w1t_ref.shape[0]
    H = w1t_ref.shape[1]

    s_acc = jnp.zeros((D, TB), jnp.float32)         # deferred log-det partials

    for i in range(N):                               # static unroll (N=4)
        # --- First Linear (contraction depth = D, tiny) ---------------------
        if D <= 8:
            # Two broadcast FMAs on the VPU instead of a degenerate K=2 matmul.
            w1i = w1t_ref[i]                         # [H, D]
            acc = w1i[:, 0:1] * z[0:1, :]            # [H,1] * [1,TB] -> [H,TB]
            for d in range(1, D):
                acc = acc + w1i[:, d:d + 1] * z[d:d + 1, :]
            h = acc + b1_ref[i]                      # [H, TB]
        else:
            h = jnp.dot(w1t_ref[i], z,
                        preferred_element_type=jnp.float32) + b1_ref[i]
        h = jnp.maximum(h, LEAKY_SLOPE * h)          # LeakyReLU

        # --- Second Linear (H x H on the MXU) --------------------------------
        h = jnp.dot(w2t_ref[i], h,
                    preferred_element_type=jnp.float32) + b2_ref[i]
        h = jnp.maximum(h, LEAKY_SLOPE * h)

        # --- Fused s/t head: one [2D, H] @ [H, TB] dot ------------------------
        st = jnp.dot(w3t_ref[i], h,
                     preferred_element_type=jnp.float32) + b3_ref[i]  # [2D, TB]
        # (1-mask) is folded into w3t/b3, so masked rows of s_raw/t are exactly 0.
        s = jnp.tanh(st[:D, :])                      # [D, TB]
        t = st[D:, :]                                # [D, TB]

        # Coupling update (mask already accounted for): z = z*exp(s) + t
        z = z * jnp.exp(s) + t
        s_acc = s_acc + s                            # defer the reduce

    z_out_ref[...] = z.astype(z_out_ref.dtype)
    logdet_out_ref[...] = jnp.sum(s_acc, axis=0, keepdims=True).astype(
        logdet_out_ref.dtype)                        # [1, TB], lane-dense store


def _default_block_b(B):
    """grid=1 on single-TC chips (v5e/v6e); two parallel lane-aligned batch
    blocks on v7x (2 TensorCores per chip)."""
    try:
        kind = jax.devices()[0].device_kind.lower()
    except Exception:
        kind = ""
    if ("v7" in kind or "7x" in kind) and B > 128:
        half = pl.cdiv(B, 2)
        return max(128, ((half + 127) // 128) * 128)  # lane-aligned half batch
    return B


def net_forward(x, masks, params, *, block_b=None):
    """x: [B, D] float32, masks: [N, D] with 0/1 entries, params: stacked
    per-layer (w1, b1, w2, b2, w3, b3). Returns (z [B, D], log_det_loss [B])."""
    w1, b1, w2, b2, w3, b3 = params
    N, D = masks.shape
    B = x.shape[0]
    H = w1.shape[-1]

    # --- offline mask folding (exact for 0/1 masks) ---------------------------
    # (z*mask) @ W1 == z @ (mask[:,None]*W1)
    w1_f = masks[:, :, None] * w1                      # [N, D, H]
    # (1-mask)*tanh(s_raw) == tanh((1-mask)*s_raw); (1-mask)*(h@W+b) distributes.
    inv2 = jnp.concatenate([1.0 - masks, 1.0 - masks], axis=-1)   # [N, 2D]
    w3_f = w3 * inv2[:, None, :]                       # [N, H, 2D]
    b3_f = b3 * inv2                                   # [N, 2D]

    # --- feature-major layout: transpose weights, biases as column vectors ---
    w1_t = jnp.transpose(w1_f, (0, 2, 1))              # [N, H, D]
    w2_t = jnp.transpose(w2, (0, 2, 1))                # [N, H, H]
    w3_t = jnp.transpose(w3_f, (0, 2, 1))              # [N, 2D, H]
    b1_c = b1[:, :, None]                              # [N, H, 1]
    b2_c = b2[:, :, None]                              # [N, H, 1]
    b3_c = b3_f[:, :, None]                            # [N, 2D, 1]

    x_fm = x.T                                         # [D, B], batch on lanes

    if block_b is None:
        block_b = _default_block_b(B)
    tb = min(block_b, B)
    grid = (pl.cdiv(B, tb),)

    def const_spec(shape):
        return pl.BlockSpec(shape, lambda i, _s=shape: (0,) * len(_s))

    def batch_spec(shape):
        return pl.BlockSpec(shape, lambda i, _s=shape: (0,) * (len(_s) - 1) + (i,))

    flops = 2 * B * N * (D * H + H * H + 2 * D * H)
    transcendentals = 2 * B * D * N                    # tanh + exp per layer
    bytes_accessed = 4 * (B * D
                          + N * (D * H + H + H * H + H + 2 * D * H + 2 * D)
                          + B * D + B)

    z_fm, logdet = pl.pallas_call(
        _net_kernel,
        out_shape=(jax.ShapeDtypeStruct((D, B), jnp.float32),
                   jax.ShapeDtypeStruct((1, B), jnp.float32)),
        grid=grid,
        in_specs=[
            const_spec((N, H, D)),        # w1^T (mask-folded)
            const_spec((N, H, 1)),        # b1
            const_spec((N, H, H)),        # w2^T
            const_spec((N, H, 1)),        # b2
            const_spec((N, 2 * D, H)),    # w3^T (inv-mask-folded, s|t heads)
            const_spec((N, 2 * D, 1)),    # b3 (inv-mask-folded)
            batch_spec((D, tb)),          # x (feature-major)
        ],
        out_specs=(batch_spec((D, tb)), batch_spec((1, tb))),
        compiler_params=pltpu.CompilerParams(
            dimension_semantics=("parallel",),
            vmem_limit_bytes=32 * 1024 * 1024),
        cost_estimate=pl.CostEstimate(flops=flops,
                                      transcendentals=transcendentals,
                                      bytes_accessed=bytes_accessed),
    )(w1_t, b1_c, w2_t, b2_c, w3_t, b3_c, x_fm)

    return z_fm.T, logdet[0]


def init_params(key, N, input_dim, hidden_dim):
    """Deterministic synthetic init (uniform, torch-Linear-style bounds)."""
    def lin(k, fan_in, fan_out):
        kw, kb = jax.random.split(k)
        bound = 1.0 / jnp.sqrt(fan_in)
        w = jax.random.uniform(kw, (N, fan_in, fan_out), jnp.float32, -bound, bound)
        b = jax.random.uniform(kb, (N, fan_out), jnp.float32, -bound, bound)
        return w, b
    k1, k2, k3 = jax.random.split(key, 3)
    w1, b1 = lin(k1, input_dim, hidden_dim)
    w2, b2 = lin(k2, hidden_dim, hidden_dim)
    w3, b3 = lin(k3, hidden_dim, 2 * input_dim)
    return (w1, b1, w2, b2, w3, b3)


def _reference_forward(x, masks, params):
    """Pure-JAX reference replicating the PyTorch semantics (reverse=False)."""
    w1, b1, w2, b2, w3, b3 = params
    B, D = x.shape
    z = x
    logdet = jnp.zeros((B,), jnp.float32)
    for i in range(masks.shape[0]):
        mask = masks[i]
        x0 = z * mask
        h = x0 @ w1[i] + b1[i]
        h = jnp.maximum(h, LEAKY_SLOPE * h)
        h = h @ w2[i] + b2[i]
        h = jnp.maximum(h, LEAKY_SLOPE * h)
        st = h @ w3[i] + b3[i]
        s, t = st[:, :D], st[:, D:]
        s = (1 - mask) * jnp.tanh(s)
        t = (1 - mask) * t
        z = x0 + (1 - mask) * (z * jnp.exp(s) + t)
        logdet = logdet + s.sum(-1)
    return z, logdet


if __name__ == "__main__":
    N = 4
    input_dim = 2       # masks [[0,1],[1,0],[0,1],[1,0]] imply D=2
    hidden_dim = 32
    batch = 256         # exercises the batch grid on v7x (2 blocks of 128)

    key = jax.random.PRNGKey(0)
    k_x, k_p = jax.random.split(key)

    masks = jnp.array([[0., 1.], [1., 0.], [0., 1.], [1., 0.]], jnp.float32)
    params = init_params(k_p, N, input_dim, hidden_dim)
    x = jax.random.normal(k_x, (batch, input_dim), jnp.float32)

    z, log_det_loss = net_forward(x, masks, params)
    z = jax.block_until_ready(z)
    log_det_loss = jax.block_until_ready(log_det_loss)

    z_ref, ld_ref = _reference_forward(x, masks, params)
    assert jnp.allclose(z, z_ref, atol=1e-5, rtol=1e-5)
    assert jnp.allclose(log_det_loss, ld_ref, atol=1e-5, rtol=1e-5)

    print("KERNEL_OK")
</pallas_src>

<mosaic_0001>
module attributes {stable_mosaic.version = 11 : i64} {
  func.func @_net_kernel(%arg0: i32, %arg1: memref<4x32x2xf32, #tpu.memory_space<vmem>>, %arg2: memref<4x32x1xf32, #tpu.memory_space<vmem>>, %arg3: memref<4x32x32xf32, #tpu.memory_space<vmem>>, %arg4: memref<4x32x1xf32, #tpu.memory_space<vmem>>, %arg5: memref<4x4x32xf32, #tpu.memory_space<vmem>>, %arg6: memref<4x4x1xf32, #tpu.memory_space<vmem>>, %arg7: memref<2x256xf32, #tpu.memory_space<vmem>>, %arg8: memref<2x256xf32, #tpu.memory_space<vmem>>, %arg9: memref<1x256xf32, #tpu.memory_space<vmem>>) attributes {dimension_semantics = [#tpu.dimension_semantics<parallel>], iteration_bounds = array<i64: 1>, scalar_prefetch = 0 : i64, scratch_operands = 0 : i64, tpu.core_type = #tpu.core_type<tc>, window_params = [{pipeline_mode = #tpu.pipeline_mode<synchronous>, transform_indices = @transform_0, window_bounds = array<i64: 4, 32, 2>}, {pipeline_mode = #tpu.pipeline_mode<synchronous>, transform_indices = @transform_1, window_bounds = array<i64: 4, 32, 1>}, {pipeline_mode = #tpu.pipeline_mode<synchronous>, transform_indices = @transform_2, window_bounds = array<i64: 4, 32, 32>}, {pipeline_mode = #tpu.pipeline_mode<synchronous>, transform_indices = @transform_3, window_bounds = array<i64: 4, 32, 1>}, {pipeline_mode = #tpu.pipeline_mode<synchronous>, transform_indices = @transform_4, window_bounds = array<i64: 4, 4, 32>}, {pipeline_mode = #tpu.pipeline_mode<synchronous>, transform_indices = @transform_5, window_bounds = array<i64: 4, 4, 1>}, {transform_indices = @transform_6, window_bounds = array<i64: 2, 256>}, {transform_indices = @transform_7, window_bounds = array<i64: 2, 256>}, {transform_indices = @transform_8, window_bounds = array<i64: 1, 256>}]} {
    %c0 = arith.constant 0 : index
    %c0_0 = arith.constant 0 : index
    %0 = vector.load %arg7[%c0, %c0_0] : memref<2x256xf32, #tpu.memory_space<vmem>>, vector<2x256xf32>
    %cst = arith.constant 0.000000e+00 : f32
    %1 = vector.broadcast %cst : f32 to vector<2x256xf32>
    %c0_1 = arith.constant 0 : index
    %c0_2 = arith.constant 0 : index
    %c0_3 = arith.constant 0 : index
    %2 = vector.load %arg1[%c0_1, %c0_2, %c0_3] : memref<4x32x2xf32, #tpu.memory_space<vmem>>, vector<1x32x2xf32>
    %3 = vector.shape_cast %2 : vector<1x32x2xf32> to vector<32x2xf32>
    %4 = vector.extract_strided_slice %3 {offsets = [0, 0], sizes = [32, 1], strides = [1, 1]} : vector<32x2xf32> to vector<32x1xf32>
    %5 = vector.extract_strided_slice %0 {offsets = [0, 0], sizes = [1, 256], strides = [1, 1]} : vector<2x256xf32> to vector<1x256xf32>
    %6 = vector.broadcast %4 : vector<32x1xf32> to vector<32x256xf32>
    %7 = vector.broadcast %5 : vector<1x256xf32> to vector<32x256xf32>
    %8 = arith.mulf %6, %7 : vector<32x256xf32>
    %9 = vector.extract_strided_slice %3 {offsets = [0, 1], sizes = [32, 1], strides = [1, 1]} : vector<32x2xf32> to vector<32x1xf32>
    %10 = vector.extract_strided_slice %0 {offsets = [1, 0], sizes = [1, 256], strides = [1, 1]} : vector<2x256xf32> to vector<1x256xf32>
    %11 = vector.broadcast %9 : vector<32x1xf32> to vector<32x256xf32>
    %12 = vector.broadcast %10 : vector<1x256xf32> to vector<32x256xf32>
    %13 = arith.mulf %11, %12 : vector<32x256xf32>
    %14 = arith.addf %8, %13 : vector<32x256xf32>
    %c0_4 = arith.constant 0 : index
    %c0_5 = arith.constant 0 : index
    %c0_6 = arith.constant 0 : index
    %15 = vector.load %arg2[%c0_4, %c0_5, %c0_6] : memref<4x32x1xf32, #tpu.memory_space<vmem>>, vector<1x32x1xf32>
    %16 = vector.shape_cast %15 : vector<1x32x1xf32> to vector<32x1xf32>
    %17 = vector.broadcast %16 : vector<32x1xf32> to vector<32x256xf32>
    %18 = arith.addf %14, %17 : vector<32x256xf32>
    %cst_7 = arith.constant 0.00999999977 : f32
    %19 = vector.broadcast %cst_7 : f32 to vector<32x256xf32>
    %20 = arith.mulf %19, %18 : vector<32x256xf32>
    %21 = arith.maximumf %18, %20 : vector<32x256xf32>
    %c0_8 = arith.constant 0 : index
    %c0_9 = arith.constant 0 : index
    %c0_10 = arith.constant 0 : index
    %22 = vector.load %arg3[%c0_8, %c0_9, %c0_10] : memref<4x32x32xf32, #tpu.memory_space<vmem>>, vector<1x32x32xf32>
    %23 = vector.shape_cast %22 : vector<1x32x32xf32> to vector<32x32xf32>
    %cst_11 = arith.constant dense<0.000000e+00> : vector<32x256xf32>
    %24 = tpu.matmul %23, %21, %cst_11 {dimension_numbers = #tpu.dot_dimension_numbers<[1], [0], [0], [1], [0, 0, 1, 1], [], []>} : vector<32x32xf32>, vector<32x256xf32>, vector<32x256xf32> -> vector<32x256xf32>
    %c0_12 = arith.constant 0 : index
    %c0_13 = arith.constant 0 : index
    %c0_14 = arith.constant 0 : index
    %25 = vector.load %arg4[%c0_12, %c0_13, %c0_14] : memref<4x32x1xf32, #tpu.memory_space<vmem>>, vector<1x32x1xf32>
    %26 = vector.shape_cast %25 : vector<1x32x1xf32> to vector<32x1xf32>
    %27 = vector.broadcast %26 : vector<32x1xf32> to vector<32x256xf32>
    %28 = arith.addf %24, %27 : vector<32x256xf32>
    %cst_15 = arith.constant 0.00999999977 : f32
    %29 = vector.broadcast %cst_15 : f32 to vector<32x256xf32>
    %30 = arith.mulf %29, %28 : vector<32x256xf32>
    %31 = arith.maximumf %28, %30 : vector<32x256xf32>
    %c0_16 = arith.constant 0 : index
    %c0_17 = arith.constant 0 : index
    %c0_18 = arith.constant 0 : index
    %32 = vector.load %arg5[%c0_16, %c0_17, %c0_18] : memref<4x4x32xf32, #tpu.memory_space<vmem>>, vector<1x4x32xf32>
    %33 = vector.shape_cast %32 : vector<1x4x32xf32> to vector<4x32xf32>
    %cst_19 = arith.constant dense<0.000000e+00> : vector<4x256xf32>
    %34 = tpu.matmul %33, %31, %cst_19 {dimension_numbers = #tpu.dot_dimension_numbers<[1], [0], [0], [1], [0, 0, 1, 1], [], []>} : vector<4x32xf32>, vector<32x256xf32>, vector<4x256xf32> -> vector<4x256xf32>
    %c0_20 = arith.constant 0 : index
    %c0_21 = arith.constant 0 : index
    %c0_22 = arith.constant 0 : index
    %35 = vector.load %arg6[%c0_20, %c0_21, %c0_22] : memref<4x4x1xf32, #tpu.memory_space<vmem>>, vector<1x4x1xf32>
    %36 = vector.shape_cast %35 : vector<1x4x1xf32> to vector<4x1xf32>
    %37 = vector.broadcast %36 : vector<4x1xf32> to vector<4x256xf32>
    %38 = arith.addf %34, %37 : vector<4x256xf32>
    %39 = vector.extract_strided_slice %38 {offsets = [0, 0], sizes = [2, 256], strides = [1, 1]} : vector<4x256xf32> to vector<2x256xf32>
    %40 = math.tanh %39 : vector<2x256xf32>
    %41 = vector.extract_strided_slice %38 {offsets = [2, 0], sizes = [2, 256], strides = [1, 1]} : vector<4x256xf32> to vector<2x256xf32>
    %42 = math.exp %40 : vector<2x256xf32>
    %43 = arith.mulf %0, %42 : vector<2x256xf32>
    %44 = arith.addf %43, %41 : vector<2x256xf32>
    %45 = arith.addf %1, %40 : vector<2x256xf32>
    %c1 = arith.constant 1 : index
    %c0_23 = arith.constant 0 : index
    %c0_24 = arith.constant 0 : index
    %46 = vector.load %arg1[%c1, %c0_23, %c0_24] : memref<4x32x2xf32, #tpu.memory_space<vmem>>, vector<1x32x2xf32>
    %47 = vector.shape_cast %46 : vector<1x32x2xf32> to vector<32x2xf32>
    %48 = vector.extract_strided_slice %47 {offsets = [0, 0], sizes = [32, 1], strides = [1, 1]} : vector<32x2xf32> to vector<32x1xf32>
    %49 = vector.extract_strided_slice %44 {offsets = [0, 0], sizes = [1, 256], strides = [1, 1]} : vector<2x256xf32> to vector<1x256xf32>
    %50 = vector.broadcast %48 : vector<32x1xf32> to vector<32x256xf32>
    %51 = vector.broadcast %49 : vector<1x256xf32> to vector<32x256xf32>
    %52 = arith.mulf %50, %51 : vector<32x256xf32>
    %53 = vector.extract_strided_slice %47 {offsets = [0, 1], sizes = [32, 1], strides = [1, 1]} : vector<32x2xf32> to vector<32x1xf32>
    %54 = vector.extract_strided_slice %44 {offsets = [1, 0], sizes = [1, 256], strides = [1, 1]} : vector<2x256xf32> to vector<1x256xf32>
    %55 = vector.broadcast %53 : vector<32x1xf32> to vector<32x256xf32>
    %56 = vector.broadcast %54 : vector<1x256xf32> to vector<32x256xf32>
    %57 = arith.mulf %55, %56 : vector<32x256xf32>
    %58 = arith.addf %52, %57 : vector<32x256xf32>
    %c1_25 = arith.constant 1 : index
    %c0_26 = arith.constant 0 : index
    %c0_27 = arith.constant 0 : index
    %59 = vector.load %arg2[%c1_25, %c0_26, %c0_27] : memref<4x32x1xf32, #tpu.memory_space<vmem>>, vector<1x32x1xf32>
    %60 = vector.shape_cast %59 : vector<1x32x1xf32> to vector<32x1xf32>
    %61 = vector.broadcast %60 : vector<32x1xf32> to vector<32x256xf32>
    %62 = arith.addf %58, %61 : vector<32x256xf32>
    %cst_28 = arith.constant 0.00999999977 : f32
    %63 = vector.broadcast %cst_28 : f32 to vector<32x256xf32>
    %64 = arith.mulf %63, %62 : vector<32x256xf32>
    %65 = arith.maximumf %62, %64 : vector<32x256xf32>
    %c1_29 = arith.constant 1 : index
    %c0_30 = arith.constant 0 : index
    %c0_31 = arith.constant 0 : index
    %66 = vector.load %arg3[%c1_29, %c0_30, %c0_31] : memref<4x32x32xf32, #tpu.memory_space<vmem>>, vector<1x32x32xf32>
    %67 = vector.shape_cast %66 : vector<1x32x32xf32> to vector<32x32xf32>
    %cst_32 = arith.constant dense<0.000000e+00> : vector<32x256xf32>
    %68 = tpu.matmul %67, %65, %cst_32 {dimension_numbers = #tpu.dot_dimension_numbers<[1], [0], [0], [1], [0, 0, 1, 1], [], []>} : vector<32x32xf32>, vector<32x256xf32>, vector<32x256xf32> -> vector<32x256xf32>
    %c1_33 = arith.constant 1 : index
    %c0_34 = arith.constant 0 : index
    %c0_35 = arith.constant 0 : index
    %69 = vector.load %arg4[%c1_33, %c0_34, %c0_35] : memref<4x32x1xf32, #tpu.memory_space<vmem>>, vector<1x32x1xf32>
    %70 = vector.shape_cast %69 : vector<1x32x1xf32> to vector<32x1xf32>
    %71 = vector.broadcast %70 : vector<32x1xf32> to vector<32x256xf32>
    %72 = arith.addf %68, %71 : vector<32x256xf32>
    %cst_36 = arith.constant 0.00999999977 : f32
    %73 = vector.broadcast %cst_36 : f32 to vector<32x256xf32>
    %74 = arith.mulf %73, %72 : vector<32x256xf32>
    %75 = arith.maximumf %72, %74 : vector<32x256xf32>
    %c1_37 = arith.constant 1 : index
    %c0_38 = arith.constant 0 : index
    %c0_39 = arith.constant 0 : index
    %76 = vector.load %arg5[%c1_37, %c0_38, %c0_39] : memref<4x4x32xf32, #tpu.memory_space<vmem>>, vector<1x4x32xf32>
    %77 = vector.shape_cast %76 : vector<1x4x32xf32> to vector<4x32xf32>
    %cst_40 = arith.constant dense<0.000000e+00> : vector<4x256xf32>
    %78 = tpu.matmul %77, %75, %cst_40 {dimension_numbers = #tpu.dot_dimension_numbers<[1], [0], [0], [1], [0, 0, 1, 1], [], []>} : vector<4x32xf32>, vector<32x256xf32>, vector<4x256xf32> -> vector<4x256xf32>
    %c1_41 = arith.constant 1 : index
    %c0_42 = arith.constant 0 : index
    %c0_43 = arith.constant 0 : index
    %79 = vector.load %arg6[%c1_41, %c0_42, %c0_43] : memref<4x4x1xf32, #tpu.memory_space<vmem>>, vector<1x4x1xf32>
    %80 = vector.shape_cast %79 : vector<1x4x1xf32> to vector<4x1xf32>
    %81 = vector.broadcast %80 : vector<4x1xf32> to vector<4x256xf32>
    %82 = arith.addf %78, %81 : vector<4x256xf32>
    %83 = vector.extract_strided_slice %82 {offsets = [0, 0], sizes = [2, 256], strides = [1, 1]} : vector<4x256xf32> to vector<2x256xf32>
    %84 = math.tanh %83 : vector<2x256xf32>
    %85 = vector.extract_strided_slice %82 {offsets = [2, 0], sizes = [2, 256], strides = [1, 1]} : vector<4x256xf32> to vector<2x256xf32>
    %86 = math.exp %84 : vector<2x256xf32>
    %87 = arith.mulf %44, %86 : vector<2x256xf32>
    %88 = arith.addf %87, %85 : vector<2x256xf32>
    %89 = arith.addf %45, %84 : vector<2x256xf32>
    %c2 = arith.constant 2 : index
    %c0_44 = arith.constant 0 : index
    %c0_45 = arith.constant 0 : index
    %90 = vector.load %arg1[%c2, %c0_44, %c0_45] : memref<4x32x2xf32, #tpu.memory_space<vmem>>, vector<1x32x2xf32>
    %91 = vector.shape_cast %90 : vector<1x32x2xf32> to vector<32x2xf32>
    %92 = vector.extract_strided_slice %91 {offsets = [0, 0], sizes = [32, 1], strides = [1, 1]} : vector<32x2xf32> to vector<32x1xf32>
    %93 = vector.extract_strided_slice %88 {offsets = [0, 0], sizes = [1, 256], strides = [1, 1]} : vector<2x256xf32> to vector<1x256xf32>
    %94 = vector.broadcast %92 : vector<32x1xf32> to vector<32x256xf32>
    %95 = vector.broadcast %93 : vector<1x256xf32> to vector<32x256xf32>
    %96 = arith.mulf %94, %95 : vector<32x256xf32>
    %97 = vector.extract_strided_slice %91 {offsets = [0, 1], sizes = [32, 1], strides = [1, 1]} : vector<32x2xf32> to vector<32x1xf32>
    %98 = vector.extract_strided_slice %88 {offsets = [1, 0], sizes = [1, 256], strides = [1, 1]} : vector<2x256xf32> to vector<1x256xf32>
    %99 = vector.broadcast %97 : vector<32x1xf32> to vector<32x256xf32>
    %100 = vector.broadcast %98 : vector<1x256xf32> to vector<32x256xf32>
    %101 = arith.mulf %99, %100 : vector<32x256xf32>
    %102 = arith.addf %96, %101 : vector<32x256xf32>
    %c2_46 = arith.constant 2 : index
    %c0_47 = arith.constant 0 : index
    %c0_48 = arith.constant 0 : index
    %103 = vector.load %arg2[%c2_46, %c0_47, %c0_48] : memref<4x32x1xf32, #tpu.memory_space<vmem>>, vector<1x32x1xf32>
    %104 = vector.shape_cast %103 : vector<1x32x1xf32> to vector<32x1xf32>
    %105 = vector.broadcast %104 : vector<32x1xf32> to vector<32x256xf32>
    %106 = arith.addf %102, %105 : vector<32x256xf32>
    %cst_49 = arith.constant 0.00999999977 : f32
    %107 = vector.broadcast %cst_49 : f32 to vector<32x256xf32>
    %108 = arith.mulf %107, %106 : vector<32x256xf32>
    %109 = arith.maximumf %106, %108 : vector<32x256xf32>
    %c2_50 = arith.constant 2 : index
    %c0_51 = arith.constant 0 : index
    %c0_52 = arith.constant 0 : index
    %110 = vector.load %arg3[%c2_50, %c0_51, %c0_52] : memref<4x32x32xf32, #tpu.memory_space<vmem>>, vector<1x32x32xf32>
    %111 = vector.shape_cast %110 : vector<1x32x32xf32> to vector<32x32xf32>
    %cst_53 = arith.constant dense<0.000000e+00> : vector<32x256xf32>
    %112 = tpu.matmul %111, %109, %cst_53 {dimension_numbers = #tpu.dot_dimension_numbers<[1], [0], [0], [1], [0, 0, 1, 1], [], []>} : vector<32x32xf32>, vector<32x256xf32>, vector<32x256xf32> -> vector<32x256xf32>
    %c2_54 = arith.constant 2 : index
    %c0_55 = arith.constant 0 : index
    %c0_56 = arith.constant 0 : index
    %113 = vector.load %arg4[%c2_54, %c0_55, %c0_56] : memref<4x32x1xf32, #tpu.memory_space<vmem>>, vector<1x32x1xf32>
    %114 = vector.shape_cast %113 : vector<1x32x1xf32> to vector<32x1xf32>
    %115 = vector.broadcast %114 : vector<32x1xf32> to vector<32x256xf32>
    %116 = arith.addf %112, %115 : vector<32x256xf32>
    %cst_57 = arith.constant 0.00999999977 : f32
    %117 = vector.broadcast %cst_57 : f32 to vector<32x256xf32>
    %118 = arith.mulf %117, %116 : vector<32x256xf32>
    %119 = arith.maximumf %116, %118 : vector<32x256xf32>
    %c2_58 = arith.constant 2 : index
    %c0_59 = arith.constant 0 : index
    %c0_60 = arith.constant 0 : index
    %120 = vector.load %arg5[%c2_58, %c0_59, %c0_60] : memref<4x4x32xf32, #tpu.memory_space<vmem>>, vector<1x4x32xf32>
    %121 = vector.shape_cast %120 : vector<1x4x32xf32> to vector<4x32xf32>
    %cst_61 = arith.constant dense<0.000000e+00> : vector<4x256xf32>
    %122 = tpu.matmul %121, %119, %cst_61 {dimension_numbers = #tpu.dot_dimension_numbers<[1], [0], [0], [1], [0, 0, 1, 1], [], []>} : vector<4x32xf32>, vector<32x256xf32>, vector<4x256xf32> -> vector<4x256xf32>
    %c2_62 = arith.constant 2 : index
    %c0_63 = arith.constant 0 : index
    %c0_64 = arith.constant 0 : index
    %123 = vector.load %arg6[%c2_62, %c0_63, %c0_64] : memref<4x4x1xf32, #tpu.memory_space<vmem>>, vector<1x4x1xf32>
    %124 = vector.shape_cast %123 : vector<1x4x1xf32> to vector<4x1xf32>
    %125 = vector.broadcast %124 : vector<4x1xf32> to vector<4x256xf32>
    %126 = arith.addf %122, %125 : vector<4x256xf32>
    %127 = vector.extract_strided_slice %126 {offsets = [0, 0], sizes = [2, 256], strides = [1, 1]} : vector<4x256xf32> to vector<2x256xf32>
    %128 = math.tanh %127 : vector<2x256xf32>
    %129 = vector.extract_strided_slice %126 {offsets = [2, 0], sizes = [2, 256], strides = [1, 1]} : vector<4x256xf32> to vector<2x256xf32>
    %130 = math.exp %128 : vector<2x256xf32>
    %131 = arith.mulf %88, %130 : vector<2x256xf32>
    %132 = arith.addf %131, %129 : vector<2x256xf32>
    %133 = arith.addf %89, %128 : vector<2x256xf32>
    %c3 = arith.constant 3 : index
    %c0_65 = arith.constant 0 : index
    %c0_66 = arith.constant 0 : index
    %134 = vector.load %arg1[%c3, %c0_65, %c0_66] : memref<4x32x2xf32, #tpu.memory_space<vmem>>, vector<1x32x2xf32>
    %135 = vector.shape_cast %134 : vector<1x32x2xf32> to vector<32x2xf32>
    %136 = vector.extract_strided_slice %135 {offsets = [0, 0], sizes = [32, 1], strides = [1, 1]} : vector<32x2xf32> to vector<32x1xf32>
    %137 = vector.extract_strided_slice %132 {offsets = [0, 0], sizes = [1, 256], strides = [1, 1]} : vector<2x256xf32> to vector<1x256xf32>
    %138 = vector.broadcast %136 : vector<32x1xf32> to vector<32x256xf32>
    %139 = vector.broadcast %137 : vector<1x256xf32> to vector<32x256xf32>
    %140 = arith.mulf %138, %139 : vector<32x256xf32>
    %141 = vector.extract_strided_slice %135 {offsets = [0, 1], sizes = [32, 1], strides = [1, 1]} : vector<32x2xf32> to vector<32x1xf32>
    %142 = vector.extract_strided_slice %132 {offsets = [1, 0], sizes = [1, 256], strides = [1, 1]} : vector<2x256xf32> to vector<1x256xf32>
    %143 = vector.broadcast %141 : vector<32x1xf32> to vector<32x256xf32>
    %144 = vector.broadcast %142 : vector<1x256xf32> to vector<32x256xf32>
    %145 = arith.mulf %143, %144 : vector<32x256xf32>
    %146 = arith.addf %140, %145 : vector<32x256xf32>
    %c3_67 = arith.constant 3 : index
    %c0_68 = arith.constant 0 : index
    %c0_69 = arith.constant 0 : index
    %147 = vector.load %arg2[%c3_67, %c0_68, %c0_69] : memref<4x32x1xf32, #tpu.memory_space<vmem>>, vector<1x32x1xf32>
    %148 = vector.shape_cast %147 : vector<1x32x1xf32> to vector<32x1xf32>
    %149 = vector.broadcast %148 : vector<32x1xf32> to vector<32x256xf32>
    %150 = arith.addf %146, %149 : vector<32x256xf32>
    %cst_70 = arith.constant 0.00999999977 : f32
    %151 = vector.broadcast %cst_70 : f32 to vector<32x256xf32>
    %152 = arith.mulf %151, %150 : vector<32x256xf32>
    %153 = arith.maximumf %150, %152 : vector<32x256xf32>
    %c3_71 = arith.constant 3 : index
    %c0_72 = arith.constant 0 : index
    %c0_73 = arith.constant 0 : index
    %154 = vector.load %arg3[%c3_71, %c0_72, %c0_73] : memref<4x32x32xf32, #tpu.memory_space<vmem>>, vector<1x32x32xf32>
    %155 = vector.shape_cast %154 : vector<1x32x32xf32> to vector<32x32xf32>
    %cst_74 = arith.constant dense<0.000000e+00> : vector<32x256xf32>
    %156 = tpu.matmul %155, %153, %cst_74 {dimension_numbers = #tpu.dot_dimension_numbers<[1], [0], [0], [1], [0, 0, 1, 1], [], []>} : vector<32x32xf32>, vector<32x256xf32>, vector<32x256xf32> -> vector<32x256xf32>
    %c3_75 = arith.constant 3 : index
    %c0_76 = arith.constant 0 : index
    %c0_77 = arith.constant 0 : index
    %157 = vector.load %arg4[%c3_75, %c0_76, %c0_77] : memref<4x32x1xf32, #tpu.memory_space<vmem>>, vector<1x32x1xf32>
    %158 = vector.shape_cast %157 : vector<1x32x1xf32> to vector<32x1xf32>
    %159 = vector.broadcast %158 : vector<32x1xf32> to vector<32x256xf32>
    %160 = arith.addf %156, %159 : vector<32x256xf32>
    %cst_78 = arith.constant 0.00999999977 : f32
    %161 = vector.broadcast %cst_78 : f32 to vector<32x256xf32>
    %162 = arith.mulf %161, %160 : vector<32x256xf32>
    %163 = arith.maximumf %160, %162 : vector<32x256xf32>
    %c3_79 = arith.constant 3 : index
    %c0_80 = arith.constant 0 : index
    %c0_81 = arith.constant 0 : index
    %164 = vector.load %arg5[%c3_79, %c0_80, %c0_81] : memref<4x4x32xf32, #tpu.memory_space<vmem>>, vector<1x4x32xf32>
    %165 = vector.shape_cast %164 : vector<1x4x32xf32> to vector<4x32xf32>
    %cst_82 = arith.constant dense<0.000000e+00> : vector<4x256xf32>
    %166 = tpu.matmul %165, %163, %cst_82 {dimension_numbers = #tpu.dot_dimension_numbers<[1], [0], [0], [1], [0, 0, 1, 1], [], []>} : vector<4x32xf32>, vector<32x256xf32>, vector<4x256xf32> -> vector<4x256xf32>
    %c3_83 = arith.constant 3 : index
    %c0_84 = arith.constant 0 : index
    %c0_85 = arith.constant 0 : index
    %167 = vector.load %arg6[%c3_83, %c0_84, %c0_85] : memref<4x4x1xf32, #tpu.memory_space<vmem>>, vector<1x4x1xf32>
    %168 = vector.shape_cast %167 : vector<1x4x1xf32> to vector<4x1xf32>
    %169 = vector.broadcast %168 : vector<4x1xf32> to vector<4x256xf32>
    %170 = arith.addf %166, %169 : vector<4x256xf32>
    %171 = vector.extract_strided_slice %170 {offsets = [0, 0], sizes = [2, 256], strides = [1, 1]} : vector<4x256xf32> to vector<2x256xf32>
    %172 = math.tanh %171 : vector<2x256xf32>
    %173 = vector.extract_strided_slice %170 {offsets = [2, 0], sizes = [2, 256], strides = [1, 1]} : vector<4x256xf32> to vector<2x256xf32>
    %174 = math.exp %172 : vector<2x256xf32>
    %175 = arith.mulf %132, %174 : vector<2x256xf32>
    %176 = arith.addf %175, %173 : vector<2x256xf32>
    %177 = arith.addf %133, %172 : vector<2x256xf32>
    %c0_86 = arith.constant 0 : index
    %c0_87 = arith.constant 0 : index
    %178 = vector.load %arg8[%c0_86, %c0_87] : memref<2x256xf32, #tpu.memory_space<vmem>>, vector<2x256xf32>
    tpu.vector_store %arg8[%c0_86, %c0_87], %176 {strides = array<i32>} : memref<2x256xf32, #tpu.memory_space<vmem>>, vector<2x256xf32>,
    %cst_88 = arith.constant dense<0.000000e+00> : vector<256xf32>
    %179 = vector.multi_reduction <add>, %177, %cst_88 [0] : vector<2x256xf32> to vector<256xf32>
    %180 = vector.shape_cast %179 : vector<256xf32> to vector<1x256xf32>
    %c0_89 = arith.constant 0 : index
    %c0_90 = arith.constant 0 : index
    %181 = vector.load %arg9[%c0_89, %c0_90] : memref<1x256xf32, #tpu.memory_space<vmem>>, vector<1x256xf32>
    tpu.vector_store %arg9[%c0_89, %c0_90], %180 {strides = array<i32>} : memref<1x256xf32, #tpu.memory_space<vmem>>, vector<1x256xf32>,
    return
  }
  func.func @transform_0(%arg0: i32) -> (i32, i32, i32) {
    %c0_i32 = arith.constant 0 : i32
    %c0_i32_0 = arith.constant 0 : i32
    %c0_i32_1 = arith.constant 0 : i32
    %c0_i32_2 = arith.constant 0 : i32
    return %c0_i32, %c0_i32_0, %c0_i32_1 : i32, i32, i32
  }
  func.func @transform_1(%arg0: i32) -> (i32, i32, i32) {
    %c0_i32 = arith.constant 0 : i32
    %c0_i32_0 = arith.constant 0 : i32
    %c0_i32_1 = arith.constant 0 : i32
    %c0_i32_2 = arith.constant 0 : i32
    return %c0_i32, %c0_i32_0, %c0_i32_1 : i32, i32, i32
  }
  func.func @transform_2(%arg0: i32) -> (i32, i32, i32) {
    %c0_i32 = arith.constant 0 : i32
    %c0_i32_0 = arith.constant 0 : i32
    %c0_i32_1 = arith.constant 0 : i32
    %c0_i32_2 = arith.constant 0 : i32
    return %c0_i32, %c0_i32_0, %c0_i32_1 : i32, i32, i32
  }
  func.func @transform_3(%arg0: i32) -> (i32, i32, i32) {
    %c0_i32 = arith.constant 0 : i32
    %c0_i32_0 = arith.constant 0 : i32
    %c0_i32_1 = arith.constant 0 : i32
    %c0_i32_2 = arith.constant 0 : i32
    return %c0_i32, %c0_i32_0, %c0_i32_1 : i32, i32, i32
  }
  func.func @transform_4(%arg0: i32) -> (i32, i32, i32) {
    %c0_i32 = arith.constant 0 : i32
    %c0_i32_0 = arith.constant 0 : i32
    %c0_i32_1 = arith.constant 0 : i32
    %c0_i32_2 = arith.constant 0 : i32
    return %c0_i32, %c0_i32_0, %c0_i32_1 : i32, i32, i32
  }
  func.func @transform_5(%arg0: i32) -> (i32, i32, i32) {
    %c0_i32 = arith.constant 0 : i32
    %c0_i32_0 = arith.constant 0 : i32
    %c0_i32_1 = arith.constant 0 : i32
    %c0_i32_2 = arith.constant 0 : i32
    return %c0_i32, %c0_i32_0, %c0_i32_1 : i32, i32, i32
  }
  func.func @transform_6(%arg0: i32) -> (i32, i32) {
    %c0_i32 = arith.constant 0 : i32
    %c0_i32_0 = arith.constant 0 : i32
    return %c0_i32, %arg0 : i32, i32
  }
  func.func @transform_7(%arg0: i32) -> (i32, i32) {
    %c0_i32 = arith.constant 0 : i32
    %c0_i32_0 = arith.constant 0 : i32
    return %c0_i32, %arg0 : i32, i32
  }
  func.func @transform_8(%arg0: i32) -> (i32, i32) {
    %c0_i32 = arith.constant 0 : i32
    %c0_i32_0 = arith.constant 0 : i32
    return %c0_i32, %arg0 : i32, i32
  }
}

</mosaic_0001>

<llo_original>
// kernel: tpu_custom_call.1
$region0: #{tpu_custom_call.1}
  #allocation0 [shape = 'u32[]', space=smem, size = 0x4, offset = 0x4, fixed_abs, tag = 'smem constant byte address 0x4 - core index']
  #allocation1 [shape = 'u32[144,128]{1,0:T(1,128)}', space=vmem, size = 0x12000, scoped, tag = 'internal scratch']
  %s0 = inlined_call_operand.vmem [shape: f32[4,32,2], index: 0, kind: input, shape index: {}]
  %s1 = inlined_call_operand.vmem [shape: f32[4,32,1], index: 1, kind: input, shape index: {}]
  %s2 = inlined_call_operand.vmem [shape: f32[4,32,32], index: 2, kind: input, shape index: {}]
  %s3 = inlined_call_operand.vmem [shape: f32[4,32,1], index: 3, kind: input, shape index: {}]
  %s4 = inlined_call_operand.vmem [shape: f32[4,4,32], index: 4, kind: input, shape index: {}]
  %s5 = inlined_call_operand.vmem [shape: f32[4,4,1], index: 5, kind: input, shape index: {}]
  %s6 = inlined_call_operand.vmem [shape: f32[2,256], index: 6, kind: input, shape index: {}]
  %s7 = inlined_call_operand.hbm [shape: f32[2,256], index: 7, kind: output, shape index: {0}]
  %s8 = inlined_call_operand.hbm [shape: f32[1,256], index: 8, kind: output, shape index: {1}]
  %9 = xla_tuple %s7, %s8
  %s10 = sld [smem:[#allocation0]]
  $region46: #{tpu_custom_call.1} parent=0
    _
  %s12 = ssub.s32 1, %s10
  %s13 = scalar_select 0, %s12, %s10
  $region1: #{tpu_custom_call.1} parent=0
    #allocation2 [shape = 'u8[2048]{0}', space=vmem, size = 0x800, scoped, tag = 'output window, operand 0, single buffered']
    #allocation3 [shape = 's32[1]{0}', space=sflag, size = 0x4, scoped, tag = 'scoped memory for tpu_custom_call.1']
    #allocation4 [shape = 'u8[1024]{0}', space=vmem, size = 0x400, scoped, tag = 'output window, operand 1, single buffered']
    #allocation5 [shape = 's32[1]{0}', space=sflag, size = 0x4, scoped, tag = 'scoped memory for tpu_custom_call.1']
    %14 = vsyncpa [#allocation3], 0
    %15 = vsyncpa [#allocation5], 0
    // Predicated region
    $region2: #{tpu_custom_call.1} parent=1 // pred_check
      _
    $region3: #{tpu_custom_call.1} parent=1 // pred_check_branch
      %17 = sbr.rel (0) target = $region5
    $region4: #{tpu_custom_call.1} parent=1 // pred_region
      _
    $region5: #{tpu_custom_call.1} parent=1 // pred_fallthru
      _
    // Predicated region
    $region6: #{tpu_custom_call.1} parent=1 // pred_check
      _
    $region7: #{tpu_custom_call.1} parent=1 // pred_check_branch
      %19 = sbr.rel (0) target = $region9
    $region8: #{tpu_custom_call.1} parent=1 // pred_region
      _
    $region9: #{tpu_custom_call.1} parent=1 // pred_fallthru
      _
    // Predicated region
    $region10: #{tpu_custom_call.1} parent=1 // pred_check
      _
    $region11: #{tpu_custom_call.1} parent=1 // pred_check_branch
      %21 = sbr.rel (0) target = $region13
    $region12: #{tpu_custom_call.1} parent=1 // pred_region
      _
    $region13: #{tpu_custom_call.1} parent=1 // pred_fallthru
      _
    // Predicated region
    $region14: #{tpu_custom_call.1} parent=1 // pred_check
      _
    $region15: #{tpu_custom_call.1} parent=1 // pred_check_branch
      %23 = sbr.rel (0) target = $region17
    $region16: #{tpu_custom_call.1} parent=1 // pred_region
      _
    $region17: #{tpu_custom_call.1} parent=1 // pred_fallthru
      _
    // Predicated region
    $region18: #{tpu_custom_call.1} parent=1 // pred_check
      _
    $region19: #{tpu_custom_call.1} parent=1 // pred_check_branch
      %25 = sbr.rel (0) target = $region21
    $region20: #{tpu_custom_call.1} parent=1 // pred_region
      _
    $region21: #{tpu_custom_call.1} parent=1 // pred_fallthru
      _
    // Predicated region
    $region22: #{tpu_custom_call.1} parent=1 // pred_check
      _
    $region23: #{tpu_custom_call.1} parent=1 // pred_check_branch
      %27 = sbr.rel (0) target = $region25
    $region24: #{tpu_custom_call.1} parent=1 // pred_region
      _
    $region25: #{tpu_custom_call.1} parent=1 // pred_fallthru
      _
    // Predicated region
    $region26: #{tpu_custom_call.1} parent=1 // pred_check
      _
    $region27: #{tpu_custom_call.1} parent=1 // pred_check_branch
      %29 = sbr.rel (0) target = $region29
    $region28: #{tpu_custom_call.1} parent=1 // pred_region
      _
    $region29: #{tpu_custom_call.1} parent=1 // pred_fallthru
      _
    %v30 = vld [vmem:[%s6] sm:$0xf]
    %v31 = vld [vmem:[%s0] sm:$0xff]
    %v32 = vld [vmem:[%s0 + $0x8] sm:$0xff]
    %v33 = vld [vmem:[%s0 + $0x10] sm:$0xff]
    %v34 = vld [vmem:[%s0 + $0x18] sm:$0xff]
    %36 = vset.pattern.permute.xlu0 0
    %37 = vperm.xlu0 %36, %v31
    %v38 = vpop.permute.xlu0 %37
    %41 = vset.pattern.permute.xlu0 0
    %42 = vperm.xlu0 %41, %v32
    %v43 = vpop.permute.xlu0 %42
    %46 = vset.pattern.permute.xlu0 0
    %47 = vperm.xlu0 %46, %v33
    %v48 = vpop.permute.xlu0 %47
    %51 = vset.pattern.permute.xlu0 0
    %52 = vperm.xlu0 %51, %v34
    %v53 = vpop.permute.xlu0 %52
    %v56 = vlaneseq
    %v57 = vshrl.u32 %v56, 7
    %v58 = vsub.s32 0, %v57
    %v59 = vrot.slane %v30, %v58
    %v60 = vlaneseq
    %v61 = vshrl.u32 %v60, 7
    %v62 = vsub.s32 2, %v61
    %v63 = vrot.slane %v30, %v62
    %v66 = vlaneseq
    %v67 = vshrl.u32 %v66, 7
    %v68 = vsub.s32 0, %v67
    %v69 = vrot.slane %v59, %v68
    %v70 = vlaneseq
    %v71 = vshrl.u32 %v70, 7
    %v72 = vsub.s32 0, %v71
    %v73 = vrot.slane %v63, %v72
    %v74 = vmul.f32 %v38, %v69
    %v75 = vmul.f32 %v38, %v73
    %v76 = vmul.f32 %v43, %v69
    %v77 = vmul.f32 %v43, %v73
    %v78 = vmul.f32 %v48, %v69
    %v79 = vmul.f32 %v48, %v73
    %v80 = vmul.f32 %v53, %v69
    %v81 = vmul.f32 %v53, %v73
    %82 = vset.pattern.permute.xlu0 1
    %83 = vperm.xlu0 %82, %v31
    %v84 = vpop.permute.xlu0 %83
    %86 = vset.pattern.permute.xlu0 1
    %87 = vperm.xlu0 %86, %v32
    %v88 = vpop.permute.xlu0 %87
    %90 = vset.pattern.permute.xlu0 1
    %91 = vperm.xlu0 %90, %v33
    %v92 = vpop.permute.xlu0 %91
    %94 = vset.pattern.permute.xlu0 1
    %95 = vperm.xlu0 %94, %v34
    %v96 = vpop.permute.xlu0 %95
    %v98 = vlaneseq
    %v99 = vshrl.u32 %v98, 7
    %v100 = vsub.s32 1, %v99
    %v101 = vrot.slane %v30, %v100
    %v102 = vlaneseq
    %v103 = vshrl.u32 %v102, 7
    %v104 = vsub.s32 3, %v103
    %v105 = vrot.slane %v30, %v104
    %v108 = vlaneseq
    %v109 = vshrl.u32 %v108, 7
    %v110 = vsub.s32 1, %v109
    %v111 = vrot.slane %v101, %v110
    %v112 = vlaneseq
    %v113 = vshrl.u32 %v112, 7
    %v114 = vsub.s32 1, %v113
    %v115 = vrot.slane %v105, %v114
    %v116 = vmul.f32 %v84, %v111
    %v117 = vmul.f32 %v84, %v115
    %v118 = vmul.f32 %v88, %v111
    %v119 = vmul.f32 %v88, %v115
    %v120 = vmul.f32 %v92, %v111
    %v121 = vmul.f32 %v92, %v115
    %v122 = vmul.f32 %v96, %v111
    %v123 = vmul.f32 %v96, %v115
    %v124 = vadd.f32 %v74, %v116
    %v125 = vadd.f32 %v75, %v117
    %v126 = vadd.f32 %v76, %v118
    %v127 = vadd.f32 %v77, %v119
    %v128 = vadd.f32 %v78, %v120
    %v129 = vadd.f32 %v79, %v121
    %v130 = vadd.f32 %v80, %v122
    %v131 = vadd.f32 %v81, %v123
    %v132 = vld [vmem:[%s1] sm:$0xff]
    %v133 = vld [vmem:[%s1 + $0x8] sm:$0xff]
    %v134 = vld [vmem:[%s1 + $0x10] sm:$0xff]
    %v135 = vld [vmem:[%s1 + $0x18] sm:$0xff]
    %137 = vset.pattern.permute.xlu0 0
    %138 = vperm.xlu0 %137, %v132
    %v139 = vpop.permute.xlu0 %138
    %142 = vset.pattern.permute.xlu0 0
    %143 = vperm.xlu0 %142, %v133
    %v144 = vpop.permute.xlu0 %143
    %147 = vset.pattern.permute.xlu0 0
    %148 = vperm.xlu0 %147, %v134
    %v149 = vpop.permute.xlu0 %148
    %152 = vset.pattern.permute.xlu0 0
    %153 = vperm.xlu0 %152, %v135
    %v154 = vpop.permute.xlu0 %153
    %v156 = vadd.f32 %v124, %v139
    %v157 = vadd.f32 %v125, %v139
    %v158 = vadd.f32 %v126, %v144
    %v159 = vadd.f32 %v127, %v144
    %v160 = vadd.f32 %v128, %v149
    %v161 = vadd.f32 %v129, %v149
    %v162 = vadd.f32 %v130, %v154
    %v163 = vadd.f32 %v131, %v154
    %v164 = vmul.f32 %v156, 0.01
    %v165 = vmul.f32 %v157, 0.01
    %v166 = vmul.f32 %v158, 0.01
    %v167 = vmul.f32 %v159, 0.01
    %v168 = vmul.f32 %v160, 0.01
    %v169 = vmul.f32 %v161, 0.01
    %v170 = vmul.f32 %v162, 0.01
    %v171 = vmul.f32 %v163, 0.01
    %v172 = vmax.f32 %v156, %v164
    %v173 = vmax.f32 %v157, %v165
    %v174 = vmax.f32 %v158, %v166
    %v175 = vmax.f32 %v159, %v167
    %v176 = vmax.f32 %v160, %v168
    %v177 = vmax.f32 %v161, %v169
    %v178 = vmax.f32 %v162, %v170
    %v179 = vmax.f32 %v163, %v171
    %v180 = vld [vmem:[%s2] sm:$0xff]
    %v181 = vld [vmem:[%s2 + $0x8] sm:$0xff]
    %v182 = vld [vmem:[%s2 + $0x10] sm:$0xff]
    %v183 = vld [vmem:[%s2 + $0x18] sm:$0xff]
    %v184 = vld [vmem:[%s3] sm:$0xff]
    %v185 = vld [vmem:[%s3 + $0x8] sm:$0xff]
    %v186 = vld [vmem:[%s3 + $0x10] sm:$0xff]
    %v187 = vld [vmem:[%s3 + $0x18] sm:$0xff]
    %189 = vset.pattern.permute.xlu0 0
    %190 = vperm.xlu0 %189, %v184
    %v191 = vpop.permute.xlu0 %190
    %194 = vset.pattern.permute.xlu0 0
    %195 = vperm.xlu0 %194, %v185
    %v196 = vpop.permute.xlu0 %195
    %199 = vset.pattern.permute.xlu0 0
    %200 = vperm.xlu0 %199, %v186
    %v201 = vpop.permute.xlu0 %200
    %204 = vset.pattern.permute.xlu0 0
    %205 = vperm.xlu0 %204, %v187
    %v206 = vpop.permute.xlu0 %205
    %vm208 = vcmask 261120
    %v210 = vsel %vm208, %v180, 0
    %v213 = vsel %vm208, %v181, 0
    %v216 = vsel %vm208, %v182, 0
    %v219 = vsel %vm208, %v183, 0
    %221 = vmatprep.subr.mxu0 %v173
    %222 = vmatpush1.msra.mxu0 %v172
    %223 = vmatprep.subr.mxu0 %v175
    %224 = vmatpush1.msra.mxu0 %v174
    %225 = vmatprep.subr.mxu0 %v177
    %226 = vmatpush1.msra.mxu0 %v176
    %227 = vmatprep.subr.mxu0 %v179
    %228 = vmatpush1.msra.mxu0 %v178
    %229 = vmatprep.subr.mxu0 0.0
    %230 = vmatpush1.msra.mxu0 0.0
    %231 = vmatprep.subr.mxu0 0.0
    %232 = vmatpush1.msra.mxu0 0.0
    %233 = vmatprep.subr.mxu0 0.0
    %234 = vmatpush1.msra.mxu0 0.0
    %235 = vmatprep.subr.mxu0 0.0
    %236 = vmatpush1.msra.mxu0 0.0
    %237 = vmatprep.subr.mxu0 0.0
    %238 = vmatpush1.msra.mxu0 0.0
    %239 = vmatprep.subr.mxu0 0.0
    %240 = vmatpush1.msra.mxu0 0.0
    %241 = vmatprep.subr.mxu0 0.0
    %242 = vmatpush1.msra.mxu0 0.0
    %243 = vmatprep.subr.mxu0 0.0
    %244 = vmatpush1.msra.mxu0 0.0
    %245 = vmatprep.subr.mxu0 0.0
    %246 = vmatpush1.msra.mxu0 0.0
    %247 = vmatprep.subr.mxu0 0.0
    %248 = vmatpush1.msra.mxu0 0.0
    %249 = vmatprep.subr.mxu0 0.0
    %250 = vmatpush1.msra.mxu0 0.0
    %251 = vmatprep.subr.mxu0 0.0
    %252 = vmatpush1.msra.mxu0 0.0
    %253 = vmatprep.subr.mxu0 0.0
    %254 = vmatpush1.msra.mxu0 0.0
    %255 = vmatprep.subr.mxu0 0.0
    %256 = vmatpush1.msra.mxu0 0.0
    %257 = vmatprep.subr.mxu0 0.0
    %258 = vmatpush1.msra.mxu0 0.0
    %259 = vmatprep.subr.mxu0 0.0
    %260 = vmatpush1.msra.mxu0 0.0
    %261 = vmatprep.subr.mxu0 0.0
    %262 = vmatpush1.msra.mxu0 0.0
    %263 = vmatprep.subr.mxu0 0.0
    %264 = vmatpush1.msra.mxu0 0.0
    %265 = vmatprep.subr.mxu0 0.0
    %266 = vmatpush1.msra.mxu0 0.0
    %267 = vmatprep.subr.mxu0 0.0
    %268 = vmatpush1.msra.mxu0 0.0
    %269 = vmatprep.subr.mxu0 0.0
    %270 = vmatpush1.msra.mxu0 0.0
    %271 = vmatprep.subr.mxu0 0.0
    %272 = vmatpush1.msra.mxu0 0.0
    %273 = vmatprep.subr.mxu0 0.0
    %274 = vmatpush1.msra.mxu0 0.0
    %275 = vmatprep.subr.mxu0 0.0
    %276 = vmatpush1.msra.mxu0 0.0
    %277 = vmatprep.subr.mxu0 0.0
    %278 = vmatpush1.msra.mxu0 0.0
    %279 = vmatprep.subr.mxu0 0.0
    %280 = vmatpush1.msra.mxu0 0.0
    %281 = vmatprep.subr.mxu0 0.0
    %282 = vmatpush1.msra.mxu0 0.0
    %283 = vmatprep.subr.mxu0 0.0
    %284 = vmatpush1.msra.mxu0 0.0
    %285 = vmatprep.mubr.f32.mxu0 0.0
    %286 = vmatmul.mubr.f32.gmra.mrb[0].mxu0 %v210
    %v287 = vpop.f32.mrb[0].mxu0
    %v288 = vadd.f32 %v191, %v287
    %v289 = vpop.f32.mrb[0].mxu0
    %v290 = vadd.f32 %v191, %v289
    %291 = vmatprep.mubr.f32.mxu0 0.0
    %292 = vmatmul.mubr.f32.gmra.mrb[0].mxu0 %v213
    %v293 = vpop.f32.mrb[0].mxu0
    %v294 = vadd.f32 %v196, %v293
    %v295 = vpop.f32.mrb[0].mxu0
    %v296 = vadd.f32 %v196, %v295
    %297 = vmatprep.mubr.f32.mxu0 0.0
    %298 = vmatmul.mubr.f32.gmra.mrb[0].mxu0 %v216
    %v299 = vpop.f32.mrb[0].mxu0
    %v300 = vadd.f32 %v201, %v299
    %v301 = vpop.f32.mrb[0].mxu0
    %v302 = vadd.f32 %v201, %v301
    %303 = vmatprep.mubr.f32.mxu0 0.0
    %304 = vmatmul.mubr.f32.gmra.mrb[0].mxu0 %v219
    %v305 = vpop.f32.mrb[0].mxu0
    %v306 = vadd.f32 %v206, %v305
    %v307 = vpop.f32.mrb[0].mxu0
    %v308 = vadd.f32 %v206, %v307
    %309 = vdwg.mxu0
    %v310 = vmul.f32 %v288, 0.01
    %v311 = vmul.f32 %v290, 0.01
    %v312 = vmul.f32 %v294, 0.01
    %v313 = vmul.f32 %v296, 0.01
    %v314 = vmul.f32 %v300, 0.01
    %v315 = vmul.f32 %v302, 0.01
    %v316 = vmul.f32 %v306, 0.01
    %v317 = vmul.f32 %v308, 0.01
    %v318 = vmax.f32 %v288, %v310
    %v319 = vmax.f32 %v290, %v311
    %v320 = vmax.f32 %v294, %v312
    %v321 = vmax.f32 %v296, %v313
    %v322 = vmax.f32 %v300, %v314
    %v323 = vmax.f32 %v302, %v315
    %v324 = vmax.f32 %v306, %v316
    %v325 = vmax.f32 %v308, %v317
    %v326 = vld [vmem:[%s4] sm:$0xf]
    %v327 = vld [vmem:[%s5] sm:$0xf]
    %329 = vset.pattern.permute.xlu0 0
    %330 = vperm.xlu0 %329, %v327
    %v331 = vpop.permute.xlu0 %330
    %v334 = vsel %vm208, %v326, 0
    %336 = vmatprep.subr.mxu0 %v319
    %337 = vmatpush1.msra.mxu0 %v318
    %338 = vmatprep.subr.mxu0 %v321
    %339 = vmatpush1.msra.mxu0 %v320
    %340 = vmatprep.subr.mxu0 %v323
    %341 = vmatpush1.msra.mxu0 %v322
    %342 = vmatprep.subr.mxu0 %v325
    %343 = vmatpush1.msra.mxu0 %v324
    %344 = vmatprep.subr.mxu0 0.0
    %345 = vmatpush1.msra.mxu0 0.0
    %346 = vmatprep.subr.mxu0 0.0
    %347 = vmatpush1.msra.mxu0 0.0
    %348 = vmatprep.subr.mxu0 0.0
    %349 = vmatpush1.msra.mxu0 0.0
    %350 = vmatprep.subr.mxu0 0.0
    %351 = vmatpush1.msra.mxu0 0.0
    %352 = vmatprep.subr.mxu0 0.0
    %353 = vmatpush1.msra.mxu0 0.0
    %354 = vmatprep.subr.mxu0 0.0
    %355 = vmatpush1.msra.mxu0 0.0
    %356 = vmatprep.subr.mxu0 0.0
    %357 = vmatpush1.msra.mxu0 0.0
    %358 = vmatprep.subr.mxu0 0.0
    %359 = vmatpush1.msra.mxu0 0.0
    %360 = vmatprep.subr.mxu0 0.0
    %361 = vmatpush1.msra.mxu0 0.0
    %362 = vmatprep.subr.mxu0 0.0
    %363 = vmatpush1.msra.mxu0 0.0
    %364 = vmatprep.subr.mxu0 0.0
    %365 = vmatpush1.msra.mxu0 0.0
    %366 = vmatprep.subr.mxu0 0.0
    %367 = vmatpush1.msra.mxu0 0.0
    %368 = vmatprep.subr.mxu0 0.0
    %369 = vmatpush1.msra.mxu0 0.0
    %370 = vmatprep.subr.mxu0 0.0
    %371 = vmatpush1.msra.mxu0 0.0
    %372 = vmatprep.subr.mxu0 0.0
    %373 = vmatpush1.msra.mxu0 0.0
    %374 = vmatprep.subr.mxu0 0.0
    %375 = vmatpush1.msra.mxu0 0.0
    %376 = vmatprep.subr.mxu0 0.0
    %377 = vmatpush1.msra.mxu0 0.0
    %378 = vmatprep.subr.mxu0 0.0
    %379 = vmatpush1.msra.mxu0 0.0
    %380 = vmatprep.subr.mxu0 0.0
    %381 = vmatpush1.msra.mxu0 0.0
    %382 = vmatprep.subr.mxu0 0.0
    %383 = vmatpush1.msra.mxu0 0.0
    %384 = vmatprep.subr.mxu0 0.0
    %385 = vmatpush1.msra.mxu0 0.0
    %386 = vmatprep.subr.mxu0 0.0
    %387 = vmatpush1.msra.mxu0 0.0
    %388 = vmatprep.subr.mxu0 0.0
    %389 = vmatpush1.msra.mxu0 0.0
    %390 = vmatprep.subr.mxu0 0.0
    %391 = vmatpush1.msra.mxu0 0.0
    %392 = vmatprep.subr.mxu0 0.0
    %393 = vmatpush1.msra.mxu0 0.0
    %394 = vmatprep.subr.mxu0 0.0
    %395 = vmatpush1.msra.mxu0 0.0
    %396 = vmatprep.subr.mxu0 0.0
    %397 = vmatpush1.msra.mxu0 0.0
    %398 = vmatprep.subr.mxu0 0.0
    %399 = vmatpush1.msra.mxu0 0.0
    %400 = vmatprep.mubr.f32.mxu0 0.0
    %401 = vmatmul.mubr.f32.gmra.mrb[0].mxu0 %v334
    %v402 = vpop.f32.mrb[0].mxu0
    %v403 = vadd.f32 %v331, %v402
    %v404 = vpop.f32.mrb[0].mxu0
    %v405 = vadd.f32 %v331, %v404
    %406 = vdwg.mxu0
    %v407 = vtanh.pop %v403
    %v408 = vtanh.pop %v405
    %v409 = vmul.f32 %v407, 1.442695
    %v410 = vpow.pop %v409
    %v411 = vmul.f32 %v408, 1.442695
    %v412 = vpow.pop %v411
    %v415 = vcombine.low %v410, %v412
    %v417 = vunpack.c.l.s4 1983009808
    %v418 = vunpack.c.0.s8 %v417
    %v419 = vlaneseq
    %v420 = vshrl.u32 %v419, 7
    %v421 = vsub.s32 %v418, %v420
    %v422 = vrot.slane %v415, %v421
    %v424 = vmul.f32 %v30, %v422
    %v427 = vcombine.low %v403, %v405
    %v429 = vunpack.c.l.s4 1983009808
    %v430 = vunpack.c.0.s8 %v429
    %v431 = vlaneseq
    %v432 = vshrl.u32 %v431, 7
    %v433 = vsub.s32 %v430, %v432
    %v434 = vrot.slane %v427, %v433
    %v435 = vcombine.high %v434, %v434
    %v437 = vadd.f32 %v424, %v435
    %v438 = vadd.f32 %v407, 0.0
    %v439 = vadd.f32 %v408, 0.0
    %s440 = scalar_lea.vmem %s0, 32
    %v441 = vld [vmem:[%s440] sm:$0xff]
    %v442 = vld [vmem:[%s440 + $0x8] sm:$0xff]
    %v443 = vld [vmem:[%s440 + $0x10] sm:$0xff]
    %v444 = vld [vmem:[%s440 + $0x18] sm:$0xff]
    %446 = vset.pattern.permute.xlu0 0
    %447 = vperm.xlu0 %446, %v441
    %v448 = vpop.permute.xlu0 %447
    %451 = vset.pattern.permute.xlu0 0
    %452 = vperm.xlu0 %451, %v442
    %v453 = vpop.permute.xlu0 %452
    %456 = vset.pattern.permute.xlu0 0
    %457 = vperm.xlu0 %456, %v443
    %v458 = vpop.permute.xlu0 %457
    %461 = vset.pattern.permute.xlu0 0
    %462 = vperm.xlu0 %461, %v444
    %v463 = vpop.permute.xlu0 %462
    %v466 = vlaneseq
    %v467 = vshrl.u32 %v466, 7
    %v468 = vsub.s32 0, %v467
    %v469 = vrot.slane %v437, %v468
    %v470 = vlaneseq
    %v471 = vshrl.u32 %v470, 7
    %v472 = vsub.s32 2, %v471
    %v473 = vrot.slane %v437, %v472
    %v476 = vlaneseq
    %v477 = vshrl.u32 %v476, 7
    %v478 = vsub.s32 0, %v477
    %v479 = vrot.slane %v469, %v478
    %v480 = vlaneseq
    %v481 = vshrl.u32 %v480, 7
    %v482 = vsub.s32 0, %v481
    %v483 = vrot.slane %v473, %v482
    %v484 = vmul.f32 %v448, %v479
    %v485 = vmul.f32 %v448, %v483
    %v486 = vmul.f32 %v453, %v479
    %v487 = vmul.f32 %v453, %v483
    %v488 = vmul.f32 %v458, %v479
    %v489 = vmul.f32 %v458, %v483
    %v490 = vmul.f32 %v463, %v479
    %v491 = vmul.f32 %v463, %v483
    %492 = vset.pattern.permute.xlu0 1
    %493 = vperm.xlu0 %492, %v441
    %v494 = vpop.permute.xlu0 %493
    %496 = vset.pattern.permute.xlu0 1
    %497 = vperm.xlu0 %496, %v442
    %v498 = vpop.permute.xlu0 %497
    %500 = vset.pattern.permute.xlu0 1
    %501 = vperm.xlu0 %500, %v443
    %v502 = vpop.permute.xlu0 %501
    %504 = vset.pattern.permute.xlu0 1
    %505 = vperm.xlu0 %504, %v444
    %v506 = vpop.permute.xlu0 %505
    %v508 = vlaneseq
    %v509 = vshrl.u32 %v508, 7
    %v510 = vsub.s32 1, %v509
    %v511 = vrot.slane %v437, %v510
    %v512 = vlaneseq
    %v513 = vshrl.u32 %v512, 7
    %v514 = vsub.s32 3, %v513
    %v515 = vrot.slane %v437, %v514
    %v518 = vlaneseq
    %v519 = vshrl.u32 %v518, 7
    %v520 = vsub.s32 1, %v519
    %v521 = vrot.slane %v511, %v520
    %v522 = vlaneseq
    %v523 = vshrl.u32 %v522, 7
    %v524 = vsub.s32 1, %v523
    %v525 = vrot.slane %v515, %v524
    %v526 = vmul.f32 %v494, %v521
    %v527 = vmul.f32 %v494, %v525
    %v528 = vmul.f32 %v498, %v521
    %v529 = vmul.f32 %v498, %v525
    %v530 = vmul.f32 %v502, %v521
    %v531 = vmul.f32 %v502, %v525
    %v532 = vmul.f32 %v506, %v521
    %v533 = vmul.f32 %v506, %v525
    %v534 = vadd.f32 %v484, %v526
    %v535 = vadd.f32 %v485, %v527
    %v536 = vadd.f32 %v486, %v528
    %v537 = vadd.f32 %v487, %v529
    %v538 = vadd.f32 %v488, %v530
    %v539 = vadd.f32 %v489, %v531
    %v540 = vadd.f32 %v490, %v532
    %v541 = vadd.f32 %v491, %v533
    %s542 = scalar_lea.vmem %s1, 32
    %v543 = vld [vmem:[%s542] sm:$0xff]
    %v544 = vld [vmem:[%s542 + $0x8] sm:$0xff]
    %v545 = vld [vmem:[%s542 + $0x10] sm:$0xff]
    %v546 = vld [vmem:[%s542 + $0x18] sm:$0xff]
    %548 = vset.pattern.permute.xlu0 0
    %549 = vperm.xlu0 %548, %v543
    %v550 = vpop.permute.xlu0 %549
    %553 = vset.pattern.permute.xlu0 0
    %554 = vperm.xlu0 %553, %v544
    %v555 = vpop.permute.xlu0 %554
    %558 = vset.pattern.permute.xlu0 0
    %559 = vperm.xlu0 %558, %v545
    %v560 = vpop.permute.xlu0 %559
    %563 = vset.pattern.permute.xlu0 0
    %564 = vperm.xlu0 %563, %v546
    %v565 = vpop.permute.xlu0 %564
    %v567 = vadd.f32 %v534, %v550
    %v568 = vadd.f32 %v535, %v550
    %v569 = vadd.f32 %v536, %v555
    %v570 = vadd.f32 %v537, %v555
    %v571 = vadd.f32 %v538, %v560
    %v572 = vadd.f32 %v539, %v560
    %v573 = vadd.f32 %v540, %v565
    %v574 = vadd.f32 %v541, %v565
    %v575 = vmul.f32 %v567, 0.01
    %v576 = vmul.f32 %v568, 0.01
    %v577 = vmul.f32 %v569, 0.01
    %v578 = vmul.f32 %v570, 0.01
    %v579 = vmul.f32 %v571, 0.01
    %v580 = vmul.f32 %v572, 0.01
    %v581 = vmul.f32 %v573, 0.01
    %v582 = vmul.f32 %v574, 0.01
    %v583 = vmax.f32 %v567, %v575
    %v584 = vmax.f32 %v568, %v576
    %v585 = vmax.f32 %v569, %v577
    %v586 = vmax.f32 %v570, %v578
    %v587 = vmax.f32 %v571, %v579
    %v588 = vmax.f32 %v572, %v580
    %v589 = vmax.f32 %v573, %v581
    %v590 = vmax.f32 %v574, %v582
    %s591 = scalar_lea.vmem %s2, 32
    %v592 = vld [vmem:[%s591] sm:$0xff]
    %v593 = vld [vmem:[%s591 + $0x8] sm:$0xff]
    %v594 = vld [vmem:[%s591 + $0x10] sm:$0xff]
    %v595 = vld [vmem:[%s591 + $0x18] sm:$0xff]
    %s596 = scalar_lea.vmem %s3, 32
    %v597 = vld [vmem:[%s596] sm:$0xff]
    %v598 = vld [vmem:[%s596 + $0x8] sm:$0xff]
    %v599 = vld [vmem:[%s596 + $0x10] sm:$0xff]
    %v600 = vld [vmem:[%s596 + $0x18] sm:$0xff]
    %602 = vset.pattern.permute.xlu0 0
    %603 = vperm.xlu0 %602, %v597
    %v604 = vpop.permute.xlu0 %603
    %607 = vset.pattern.permute.xlu0 0
    %608 = vperm.xlu0 %607, %v598
    %v609 = vpop.permute.xlu0 %608
    %612 = vset.pattern.permute.xlu0 0
    %613 = vperm.xlu0 %612, %v599
    %v614 = vpop.permute.xlu0 %613
    %617 = vset.pattern.permute.xlu0 0
    %618 = vperm.xlu0 %617, %v600
    %v619 = vpop.permute.xlu0 %618
    %v622 = vsel %vm208, %v592, 0
    %v625 = vsel %vm208, %v593, 0
    %v628 = vsel %vm208, %v594, 0
    %v631 = vsel %vm208, %v595, 0
    %633 = vmatprep.subr.mxu0 %v584
    %634 = vmatpush1.msra.mxu0 %v583
    %635 = vmatprep.subr.mxu0 %v586
    %636 = vmatpush1.msra.mxu0 %v585
    %637 = vmatprep.subr.mxu0 %v588
    %638 = vmatpush1.msra.mxu0 %v587
    %639 = vmatprep.subr.mxu0 %v590
    %640 = vmatpush1.msra.mxu0 %v589
    %641 = vmatprep.subr.mxu0 0.0
    %642 = vmatpush1.msra.mxu0 0.0
    %643 = vmatprep.subr.mxu0 0.0
    %644 = vmatpush1.msra.mxu0 0.0
    %645 = vmatprep.subr.mxu0 0.0
    %646 = vmatpush1.msra.mxu0 0.0
    %647 = vmatprep.subr.mxu0 0.0
    %648 = vmatpush1.msra.mxu0 0.0
    %649 = vmatprep.subr.mxu0 0.0
    %650 = vmatpush1.msra.mxu0 0.0
    %651 = vmatprep.subr.mxu0 0.0
    %652 = vmatpush1.msra.mxu0 0.0
    %653 = vmatprep.subr.mxu0 0.0
    %654 = vmatpush1.msra.mxu0 0.0
    %655 = vmatprep.subr.mxu0 0.0
    %656 = vmatpush1.msra.mxu0 0.0
    %657 = vmatprep.subr.mxu0 0.0
    %658 = vmatpush1.msra.mxu0 0.0
    %659 = vmatprep.subr.mxu0 0.0
    %660 = vmatpush1.msra.mxu0 0.0
    %661 = vmatprep.subr.mxu0 0.0
    %662 = vmatpush1.msra.mxu0 0.0
    %663 = vmatprep.subr.mxu0 0.0
    %664 = vmatpush1.msra.mxu0 0.0
    %665 = vmatprep.subr.mxu0 0.0
    %666 = vmatpush1.msra.mxu0 0.0
    %667 = vmatprep.subr.mxu0 0.0
    %668 = vmatpush1.msra.mxu0 0.0
    %669 = vmatprep.subr.mxu0 0.0
    %670 = vmatpush1.msra.mxu0 0.0
    %671 = vmatprep.subr.mxu0 0.0
    %672 = vmatpush1.msra.mxu0 0.0
    %673 = vmatprep.subr.mxu0 0.0
    %674 = vmatpush1.msra.mxu0 0.0
    %675 = vmatprep.subr.mxu0 0.0
    %676 = vmatpush1.msra.mxu0 0.0
    %677 = vmatprep.subr.mxu0 0.0
    %678 = vmatpush1.msra.mxu0 0.0
    %679 = vmatprep.subr.mxu0 0.0
    %680 = vmatpush1.msra.mxu0 0.0
    %681 = vmatprep.subr.mxu0 0.0
    %682 = vmatpush1.msra.mxu0 0.0
    %683 = vmatprep.subr.mxu0 0.0
    %684 = vmatpush1.msra.mxu0 0.0
    %685 = vmatprep.subr.mxu0 0.0
    %686 = vmatpush1.msra.mxu0 0.0
    %687 = vmatprep.subr.mxu0 0.0
    %688 = vmatpush1.msra.mxu0 0.0
    %689 = vmatprep.subr.mxu0 0.0
    %690 = vmatpush1.msra.mxu0 0.0
    %691 = vmatprep.subr.mxu0 0.0
    %692 = vmatpush1.msra.mxu0 0.0
    %693 = vmatprep.subr.mxu0 0.0
    %694 = vmatpush1.msra.mxu0 0.0
    %695 = vmatprep.subr.mxu0 0.0
    %696 = vmatpush1.msra.mxu0 0.0
    %697 = vmatprep.mubr.f32.mxu0 0.0
    %698 = vmatmul.mubr.f32.gmra.mrb[0].mxu0 %v622
    %v699 = vpop.f32.mrb[0].mxu0
    %v700 = vadd.f32 %v604, %v699
    %v701 = vpop.f32.mrb[0].mxu0
    %v702 = vadd.f32 %v604, %v701
    %703 = vmatprep.mubr.f32.mxu0 0.0
    %704 = vmatmul.mubr.f32.gmra.mrb[0].mxu0 %v625
    %v705 = vpop.f32.mrb[0].mxu0
    %v706 = vadd.f32 %v609, %v705
    %v707 = vpop.f32.mrb[0].mxu0
    %v708 = vadd.f32 %v609, %v707
    %709 = vmatprep.mubr.f32.mxu0 0.0
    %710 = vmatmul.mubr.f32.gmra.mrb[0].mxu0 %v628
    %v711 = vpop.f32.mrb[0].mxu0
    %v712 = vadd.f32 %v614, %v711
    %v713 = vpop.f32.mrb[0].mxu0
    %v714 = vadd.f32 %v614, %v713
    %715 = vmatprep.mubr.f32.mxu0 0.0
    %716 = vmatmul.mubr.f32.gmra.mrb[0].mxu0 %v631
    %v717 = vpop.f32.mrb[0].mxu0
    %v718 = vadd.f32 %v619, %v717
    %v719 = vpop.f32.mrb[0].mxu0
    %v720 = vadd.f32 %v619, %v719
    %721 = vdwg.mxu0
    %v722 = vmul.f32 %v700, 0.01
    %v723 = vmul.f32 %v702, 0.01
    %v724 = vmul.f32 %v706, 0.01
    %v725 = vmul.f32 %v708, 0.01
    %v726 = vmul.f32 %v712, 0.01
    %v727 = vmul.f32 %v714, 0.01
    %v728 = vmul.f32 %v718, 0.01
    %v729 = vmul.f32 %v720, 0.01
    %v730 = vmax.f32 %v700, %v722
    %v731 = vmax.f32 %v702, %v723
    %v732 = vmax.f32 %v706, %v724
    %v733 = vmax.f32 %v708, %v725
    %v734 = vmax.f32 %v712, %v726
    %v735 = vmax.f32 %v714, %v727
    %v736 = vmax.f32 %v718, %v728
    %v737 = vmax.f32 %v720, %v729
    %s738 = scalar_lea.vmem %s4, 4
    %v739 = vld [vmem:[%s738] sm:$0xf]
    %s740 = scalar_lea.vmem %s5, 4
    %v741 = vld [vmem:[%s740] sm:$0xf]
    %743 = vset.pattern.permute.xlu0 0
    %744 = vperm.xlu0 %743, %v741
    %v745 = vpop.permute.xlu0 %744
    %v748 = vsel %vm208, %v739, 0
    %750 = vmatprep.subr.mxu0 %v731
    %751 = vmatpush1.msra.mxu0 %v730
    %752 = vmatprep.subr.mxu0 %v733
    %753 = vmatpush1.msra.mxu0 %v732
    %754 = vmatprep.subr.mxu0 %v735
    %755 = vmatpush1.msra.mxu0 %v734
    %756 = vmatprep.subr.mxu0 %v737
    %757 = vmatpush1.msra.mxu0 %v736
    %758 = vmatprep.subr.mxu0 0.0
    %759 = vmatpush1.msra.mxu0 0.0
    %760 = vmatprep.subr.mxu0 0.0
    %761 = vmatpush1.msra.mxu0 0.0
    %762 = vmatprep.subr.mxu0 0.0
    %763 = vmatpush1.msra.mxu0 0.0
    %764 = vmatprep.subr.mxu0 0.0
    %765 = vmatpush1.msra.mxu0 0.0
    %766 = vmatprep.subr.mxu0 0.0
    %767 = vmatpush1.msra.mxu0 0.0
    %768 = vmatprep.subr.mxu0 0.0
    %769 = vmatpush1.msra.mxu0 0.0
    %770 = vmatprep.subr.mxu0 0.0
    %771 = vmatpush1.msra.mxu0 0.0
    %772 = vmatprep.subr.mxu0 0.0
    %773 = vmatpush1.msra.mxu0 0.0
    %774 = vmatprep.subr.mxu0 0.0
    %775 = vmatpush1.msra.mxu0 0.0
    %776 = vmatprep.subr.mxu0 0.0
    %777 = vmatpush1.msra.mxu0 0.0
    %778 = vmatprep.subr.mxu0 0.0
    %779 = vmatpush1.msra.mxu0 0.0
    %780 = vmatprep.subr.mxu0 0.0
    %781 = vmatpush1.msra.mxu0 0.0
    %782 = vmatprep.subr.mxu0 0.0
    %783 = vmatpush1.msra.mxu0 0.0
    %784 = vmatprep.subr.mxu0 0.0
    %785 = vmatpush1.msra.mxu0 0.0
    %786 = vmatprep.subr.mxu0 0.0
    %787 = vmatpush1.msra.mxu0 0.0
    %788 = vmatprep.subr.mxu0 0.0
    %789 = vmatpush1.msra.mxu0 0.0
    %790 = vmatprep.subr.mxu0 0.0
    %791 = vmatpush1.msra.mxu0 0.0
    %792 = vmatprep.subr.mxu0 0.0
    %793 = vmatpush1.msra.mxu0 0.0
    %794 = vmatprep.subr.mxu0 0.0
    %795 = vmatpush1.msra.mxu0 0.0
    %796 = vmatprep.subr.mxu0 0.0
    %797 = vmatpush1.msra.mxu0 0.0
    %798 = vmatprep.subr.mxu0 0.0
    %799 = vmatpush1.msra.mxu0 0.0
    %800 = vmatprep.subr.mxu0 0.0
    %801 = vmatpush1.msra.mxu0 0.0
    %802 = vmatprep.subr.mxu0 0.0
    %803 = vmatpush1.msra.mxu0 0.0
    %804 = vmatprep.subr.mxu0 0.0
    %805 = vmatpush1.msra.mxu0 0.0
    %806 = vmatprep.subr.mxu0 0.0
    %807 = vmatpush1.msra.mxu0 0.0
    %808 = vmatprep.subr.mxu0 0.0
    %809 = vmatpush1.msra.mxu0 0.0
    %810 = vmatprep.subr.mxu0 0.0
    %811 = vmatpush1.msra.mxu0 0.0
    %812 = vmatprep.subr.mxu0 0.0
    %813 = vmatpush1.msra.mxu0 0.0
    %814 = vmatprep.mubr.f32.mxu0 0.0
    %815 = vmatmul.mubr.f32.gmra.mrb[0].mxu0 %v748
    %v816 = vpop.f32.mrb[0].mxu0
    %v817 = vadd.f32 %v745, %v816
    %v818 = vpop.f32.mrb[0].mxu0
    %v819 = vadd.f32 %v745, %v818
    %820 = vdwg.mxu0
    %v821 = vtanh.pop %v817
    %v822 = vtanh.pop %v819
    %v823 = vmul.f32 %v821, 1.442695
    %v824 = vpow.pop %v823
    %v825 = vmul.f32 %v822, 1.442695
    %v826 = vpow.pop %v825
    %v829 = vcombine.low %v824, %v826
    %v831 = vunpack.c.l.s4 1983009808
    %v832 = vunpack.c.0.s8 %v831
    %v833 = vlaneseq
    %v834 = vshrl.u32 %v833, 7
    %v835 = vsub.s32 %v832, %v834
    %v836 = vrot.slane %v829, %v835
    %v838 = vmul.f32 %v437, %v836
    %v841 = vcombine.low %v817, %v819
    %v843 = vunpack.c.l.s4 1983009808
    %v844 = vunpack.c.0.s8 %v843
    %v845 = vlaneseq
    %v846 = vshrl.u32 %v845, 7
    %v847 = vsub.s32 %v844, %v846
    %v848 = vrot.slane %v841, %v847
    %v849 = vcombine.high %v848, %v848
    %v851 = vadd.f32 %v838, %v849
    %v852 = vadd.f32 %v438, %v821
    %v853 = vadd.f32 %v439, %v822
    %s854 = scalar_lea.vmem %s0, 64
    %v855 = vld [vmem:[%s854] sm:$0xff]
    %v856 = vld [vmem:[%s854 + $0x8] sm:$0xff]
    %v857 = vld [vmem:[%s854 + $0x10] sm:$0xff]
    %v858 = vld [vmem:[%s854 + $0x18] sm:$0xff]
    %860 = vset.pattern.permute.xlu0 0
    %861 = vperm.xlu0 %860, %v855
    %v862 = vpop.permute.xlu0 %861
    %865 = vset.pattern.permute.xlu0 0
    %866 = vperm.xlu0 %865, %v856
    %v867 = vpop.permute.xlu0 %866
    %870 = vset.pattern.permute.xlu0 0
    %871 = vperm.xlu0 %870, %v857
    %v872 = vpop.permute.xlu0 %871
    %875 = vset.pattern.permute.xlu0 0
    %876 = vperm.xlu0 %875, %v858
    %v877 = vpop.permute.xlu0 %876
    %v880 = vlaneseq
    %v881 = vshrl.u32 %v880, 7
    %v882 = vsub.s32 0, %v881
    %v883 = vrot.slane %v851, %v882
    %v884 = vlaneseq
    %v885 = vshrl.u32 %v884, 7
    %v886 = vsub.s32 2, %v885
    %v887 = vrot.slane %v851, %v886
    %v890 = vlaneseq
    %v891 = vshrl.u32 %v890, 7
    %v892 = vsub.s32 0, %v891
    %v893 = vrot.slane %v883, %v892
    %v894 = vlaneseq
    %v895 = vshrl.u32 %v894, 7
    %v896 = vsub.s32 0, %v895
    %v897 = vrot.slane %v887, %v896
    %v898 = vmul.f32 %v862, %v893
    %v899 = vmul.f32 %v862, %v897
    %v900 = vmul.f32 %v867, %v893
    %v901 = vmul.f32 %v867, %v897
    %v902 = vmul.f32 %v872, %v893
    %v903 = vmul.f32 %v872, %v897
    %v904 = vmul.f32 %v877, %v893
    %v905 = vmul.f32 %v877, %v897
    %906 = vset.pattern.permute.xlu0 1
    %907 = vperm.xlu0 %906, %v855
    %v908 = vpop.permute.xlu0 %907
    %910 = vset.pattern.permute.xlu0 1
    %911 = vperm.xlu0 %910, %v856
    %v912 = vpop.permute.xlu0 %911
    %914 = vset.pattern.permute.xlu0 1
    %915 = vperm.xlu0 %914, %v857
    %v916 = vpop.permute.xlu0 %915
    %918 = vset.pattern.permute.xlu0 1
    %919 = vperm.xlu0 %918, %v858
    %v920 = vpop.permute.xlu0 %919
    %v922 = vlaneseq
    %v923 = vshrl.u32 %v922, 7
    %v924 = vsub.s32 1, %v923
    %v925 = vrot.slane %v851, %v924
    %v926 = vlaneseq
    %v927 = vshrl.u32 %v926, 7
    %v928 = vsub.s32 3, %v927
    %v929 = vrot.slane %v851, %v928
    %v932 = vlaneseq
    %v933 = vshrl.u32 %v932, 7
    %v934 = vsub.s32 1, %v933
    %v935 = vrot.slane %v925, %v934
    %v936 = vlaneseq
    %v937 = vshrl.u32 %v936, 7
    %v938 = vsub.s32 1, %v937
    %v939 = vrot.slane %v929, %v938
    %v940 = vmul.f32 %v908, %v935
    %v941 = vmul.f32 %v908, %v939
    %v942 = vmul.f32 %v912, %v935
    %v943 = vmul.f32 %v912, %v939
    %v944 = vmul.f32 %v916, %v935
    %v945 = vmul.f32 %v916, %v939
    %v946 = vmul.f32 %v920, %v935
    %v947 = vmul.f32 %v920, %v939
    %v948 = vadd.f32 %v898, %v940
    %v949 = vadd.f32 %v899, %v941
    %v950 = vadd.f32 %v900, %v942
    %v951 = vadd.f32 %v901, %v943
    %v952 = vadd.f32 %v902, %v944
    %v953 = vadd.f32 %v903, %v945
    %v954 = vadd.f32 %v904, %v946
    %v955 = vadd.f32 %v905, %v947
    %s956 = scalar_lea.vmem %s1, 64
    %v957 = vld [vmem:[%s956] sm:$0xff]
    %v958 = vld [vmem:[%s956 + $0x8] sm:$0xff]
    %v959 = vld [vmem:[%s956 + $0x10] sm:$0xff]
    %v960 = vld [vmem:[%s956 + $0x18] sm:$0xff]
    %962 = vset.pattern.permute.xlu0 0
    %963 = vperm.xlu0 %962, %v957
    %v964 = vpop.permute.xlu0 %963
    %967 = vset.pattern.permute.xlu0 0
    %968 = vperm.xlu0 %967, %v958
    %v969 = vpop.permute.xlu0 %968
    %972 = vset.pattern.permute.xlu0 0
    %973 = vperm.xlu0 %972, %v959
    %v974 = vpop.permute.xlu0 %973
    %977 = vset.pattern.permute.xlu0 0
    %978 = vperm.xlu0 %977, %v960
    %v979 = vpop.permute.xlu0 %978
    %v981 = vadd.f32 %v948, %v964
    %v982 = vadd.f32 %v949, %v964
    %v983 = vadd.f32 %v950, %v969
    %v984 = vadd.f32 %v951, %v969
    %v985 = vadd.f32 %v952, %v974
    %v986 = vadd.f32 %v953, %v974
    %v987 = vadd.f32 %v954, %v979
    %v988 = vadd.f32 %v955, %v979
    %v989 = vmul.f32 %v981, 0.01
    %v990 = vmul.f32 %v982, 0.01
    %v991 = vmul.f32 %v983, 0.01
    %v992 = vmul.f32 %v984, 0.01
    %v993 = vmul.f32 %v985, 0.01
    %v994 = vmul.f32 %v986, 0.01
    %v995 = vmul.f32 %v987, 0.01
    %v996 = vmul.f32 %v988, 0.01
    %v997 = vmax.f32 %v981, %v989
    %v998 = vmax.f32 %v982, %v990
    %v999 = vmax.f32 %v983, %v991
    %v1000 = vmax.f32 %v984, %v992
    %v1001 = vmax.f32 %v985, %v993
    %v1002 = vmax.f32 %v986, %v994
    %v1003 = vmax.f32 %v987, %v995
    %v1004 = vmax.f32 %v988, %v996
    %s1005 = scalar_lea.vmem %s2, 64
    %v1006 = vld [vmem:[%s1005] sm:$0xff]
    %v1007 = vld [vmem:[%s1005 + $0x8] sm:$0xff]
    %v1008 = vld [vmem:[%s1005 + $0x10] sm:$0xff]
    %v1009 = vld [vmem:[%s1005 + $0x18] sm:$0xff]
    %s1010 = scalar_lea.vmem %s3, 64
    %v1011 = vld [vmem:[%s1010] sm:$0xff]
    %v1012 = vld [vmem:[%s1010 + $0x8] sm:$0xff]
    %v1013 = vld [vmem:[%s1010 + $0x10] sm:$0xff]
    %v1014 = vld [vmem:[%s1010 + $0x18] sm:$0xff]
    %1016 = vset.pattern.permute.xlu0 0
    %1017 = vperm.xlu0 %1016, %v1011
    %v1018 = vpop.permute.xlu0 %1017
    %1021 = vset.pattern.permute.xlu0 0
    %1022 = vperm.xlu0 %1021, %v1012
    %v1023 = vpop.permute.xlu0 %1022
    %1026 = vset.pattern.permute.xlu0 0
    %1027 = vperm.xlu0 %1026, %v1013
    %v1028 = vpop.permute.xlu0 %1027
    %1031 = vset.pattern.permute.xlu0 0
    %1032 = vperm.xlu0 %1031, %v1014
    %v1033 = vpop.permute.xlu0 %1032
    %v1036 = vsel %vm208, %v1006, 0
    %v1039 = vsel %vm208, %v1007, 0
    %v1042 = vsel %vm208, %v1008, 0
    %v1045 = vsel %vm208, %v1009, 0
    %1047 = vmatprep.subr.mxu0 %v998
    %1048 = vmatpush1.msra.mxu0 %v997
    %1049 = vmatprep.subr.mxu0 %v1000
    %1050 = vmatpush1.msra.mxu0 %v999
    %1051 = vmatprep.subr.mxu0 %v1002
    %1052 = vmatpush1.msra.mxu0 %v1001
    %1053 = vmatprep.subr.mxu0 %v1004
    %1054 = vmatpush1.msra.mxu0 %v1003
    %1055 = vmatprep.subr.mxu0 0.0
    %1056 = vmatpush1.msra.mxu0 0.0
    %1057 = vmatprep.subr.mxu0 0.0
    %1058 = vmatpush1.msra.mxu0 0.0
    %1059 = vmatprep.subr.mxu0 0.0
    %1060 = vmatpush1.msra.mxu0 0.0
    %1061 = vmatprep.subr.mxu0 0.0
    %1062 = vmatpush1.msra.mxu0 0.0
    %1063 = vmatprep.subr.mxu0 0.0
    %1064 = vmatpush1.msra.mxu0 0.0
    %1065 = vmatprep.subr.mxu0 0.0
    %1066 = vmatpush1.msra.mxu0 0.0
    %1067 = vmatprep.subr.mxu0 0.0
    %1068 = vmatpush1.msra.mxu0 0.0
    %1069 = vmatprep.subr.mxu0 0.0
    %1070 = vmatpush1.msra.mxu0 0.0
    %1071 = vmatprep.subr.mxu0 0.0
    %1072 = vmatpush1.msra.mxu0 0.0
    %1073 = vmatprep.subr.mxu0 0.0
    %1074 = vmatpush1.msra.mxu0 0.0
    %1075 = vmatprep.subr.mxu0 0.0
    %1076 = vmatpush1.msra.mxu0 0.0
    %1077 = vmatprep.subr.mxu0 0.0
    %1078 = vmatpush1.msra.mxu0 0.0
    %1079 = vmatprep.subr.mxu0 0.0
    %1080 = vmatpush1.msra.mxu0 0.0
    %1081 = vmatprep.subr.mxu0 0.0
    %1082 = vmatpush1.msra.mxu0 0.0
    %1083 = vmatprep.subr.mxu0 0.0
    %1084 = vmatpush1.msra.mxu0 0.0
    %1085 = vmatprep.subr.mxu0 0.0
    %1086 = vmatpush1.msra.mxu0 0.0
    %1087 = vmatprep.subr.mxu0 0.0
    %1088 = vmatpush1.msra.mxu0 0.0
    %1089 = vmatprep.subr.mxu0 0.0
    %1090 = vmatpush1.msra.mxu0 0.0
    %1091 = vmatprep.subr.mxu0 0.0
    %1092 = vmatpush1.msra.mxu0 0.0
    %1093 = vmatprep.subr.mxu0 0.0
    %1094 = vmatpush1.msra.mxu0 0.0
    %1095 = vmatprep.subr.mxu0 0.0
    %1096 = vmatpush1.msra.mxu0 0.0
    %1097 = vmatprep.subr.mxu0 0.0
    %1098 = vmatpush1.msra.mxu0 0.0
    %1099 = vmatprep.subr.mxu0 0.0
    %1100 = vmatpush1.msra.mxu0 0.0
    %1101 = vmatprep.subr.mxu0 0.0
    %1102 = vmatpush1.msra.mxu0 0.0
    %1103 = vmatprep.subr.mxu0 0.0
    %1104 = vmatpush1.msra.mxu0 0.0
    %1105 = vmatprep.subr.mxu0 0.0
    %1106 = vmatpush1.msra.mxu0 0.0
    %1107 = vmatprep.subr.mxu0 0.0
    %1108 = vmatpush1.msra.mxu0 0.0
    %1109 = vmatprep.subr.mxu0 0.0
    %1110 = vmatpush1.msra.mxu0 0.0
    %1111 = vmatprep.mubr.f32.mxu0 0.0
    %1112 = vmatmul.mubr.f32.gmra.mrb[0].mxu0 %v1036
    %v1113 = vpop.f32.mrb[0].mxu0
    %v1114 = vadd.f32 %v1018, %v1113
    %v1115 = vpop.f32.mrb[0].mxu0
    %v1116 = vadd.f32 %v1018, %v1115
    %1117 = vmatprep.mubr.f32.mxu0 0.0
    %1118 = vmatmul.mubr.f32.gmra.mrb[0].mxu0 %v1039
    %v1119 = vpop.f32.mrb[0].mxu0
    %v1120 = vadd.f32 %v1023, %v1119
    %v1121 = vpop.f32.mrb[0].mxu0
    %v1122 = vadd.f32 %v1023, %v1121
    %1123 = vmatprep.mubr.f32.mxu0 0.0
    %1124 = vmatmul.mubr.f32.gmra.mrb[0].mxu0 %v1042
    %v1125 = vpop.f32.mrb[0].mxu0
    %v1126 = vadd.f32 %v1028, %v1125
    %v1127 = vpop.f32.mrb[0].mxu0
    %v1128 = vadd.f32 %v1028, %v1127
    %1129 = vmatprep.mubr.f32.mxu0 0.0
    %1130 = vmatmul.mubr.f32.gmra.mrb[0].mxu0 %v1045
    %v1131 = vpop.f32.mrb[0].mxu0
    %v1132 = vadd.f32 %v1033, %v1131
    %v1133 = vpop.f32.mrb[0].mxu0
    %v1134 = vadd.f32 %v1033, %v1133
    %1135 = vdwg.mxu0
    %v1136 = vmul.f32 %v1114, 0.01
    %v1137 = vmul.f32 %v1116, 0.01
    %v1138 = vmul.f32 %v1120, 0.01
    %v1139 = vmul.f32 %v1122, 0.01
    %v1140 = vmul.f32 %v1126, 0.01
    %v1141 = vmul.f32 %v1128, 0.01
    %v1142 = vmul.f32 %v1132, 0.01
    %v1143 = vmul.f32 %v1134, 0.01
    %v1144 = vmax.f32 %v1114, %v1136
    %v1145 = vmax.f32 %v1116, %v1137
    %v1146 = vmax.f32 %v1120, %v1138
    %v1147 = vmax.f32 %v1122, %v1139
    %v1148 = vmax.f32 %v1126, %v1140
    %v1149 = vmax.f32 %v1128, %v1141
    %v1150 = vmax.f32 %v1132, %v1142
    %v1151 = vmax.f32 %v1134, %v1143
    %s1152 = scalar_lea.vmem %s4, 8
    %v1153 = vld [vmem:[%s1152] sm:$0xf]
    %s1154 = scalar_lea.vmem %s5, 8
    %v1155 = vld [vmem:[%s1154] sm:$0xf]
    %1157 = vset.pattern.permute.xlu0 0
    %1158 = vperm.xlu0 %1157, %v1155
    %v1159 = vpop.permute.xlu0 %1158
    %v1162 = vsel %vm208, %v1153, 0
    %1164 = vmatprep.subr.mxu0 %v1145
    %1165 = vmatpush1.msra.mxu0 %v1144
    %1166 = vmatprep.subr.mxu0 %v1147
    %1167 = vmatpush1.msra.mxu0 %v1146
    %1168 = vmatprep.subr.mxu0 %v1149
    %1169 = vmatpush1.msra.mxu0 %v1148
    %1170 = vmatprep.subr.mxu0 %v1151
    %1171 = vmatpush1.msra.mxu0 %v1150
    %1172 = vmatprep.subr.mxu0 0.0
    %1173 = vmatpush1.msra.mxu0 0.0
    %1174 = vmatprep.subr.mxu0 0.0
    %1175 = vmatpush1.msra.mxu0 0.0
    %1176 = vmatprep.subr.mxu0 0.0
    %1177 = vmatpush1.msra.mxu0 0.0
    %1178 = vmatprep.subr.mxu0 0.0
    %1179 = vmatpush1.msra.mxu0 0.0
    %1180 = vmatprep.subr.mxu0 0.0
    %1181 = vmatpush1.msra.mxu0 0.0
    %1182 = vmatprep.subr.mxu0 0.0
    %1183 = vmatpush1.msra.mxu0 0.0
    %1184 = vmatprep.subr.mxu0 0.0
    %1185 = vmatpush1.msra.mxu0 0.0
    %1186 = vmatprep.subr.mxu0 0.0
    %1187 = vmatpush1.msra.mxu0 0.0
    %1188 = vmatprep.subr.mxu0 0.0
    %1189 = vmatpush1.msra.mxu0 0.0
    %1190 = vmatprep.subr.mxu0 0.0
    %1191 = vmatpush1.msra.mxu0 0.0
    %1192 = vmatprep.subr.mxu0 0.0
    %1193 = vmatpush1.msra.mxu0 0.0
    %1194 = vmatprep.subr.mxu0 0.0
    %1195 = vmatpush1.msra.mxu0 0.0
    %1196 = vmatprep.subr.mxu0 0.0
    %1197 = vmatpush1.msra.mxu0 0.0
    %1198 = vmatprep.subr.mxu0 0.0
    %1199 = vmatpush1.msra.mxu0 0.0
    %1200 = vmatprep.subr.mxu0 0.0
    %1201 = vmatpush1.msra.mxu0 0.0
    %1202 = vmatprep.subr.mxu0 0.0
    %1203 = vmatpush1.msra.mxu0 0.0
    %1204 = vmatprep.subr.mxu0 0.0
    %1205 = vmatpush1.msra.mxu0 0.0
    %1206 = vmatprep.subr.mxu0 0.0
    %1207 = vmatpush1.msra.mxu0 0.0
    %1208 = vmatprep.subr.mxu0 0.0
    %1209 = vmatpush1.msra.mxu0 0.0
    %1210 = vmatprep.subr.mxu0 0.0
    %1211 = vmatpush1.msra.mxu0 0.0
    %1212 = vmatprep.subr.mxu0 0.0
    %1213 = vmatpush1.msra.mxu0 0.0
    %1214 = vmatprep.subr.mxu0 0.0
    %1215 = vmatpush1.msra.mxu0 0.0
    %1216 = vmatprep.subr.mxu0 0.0
    %1217 = vmatpush1.msra.mxu0 0.0
    %1218 = vmatprep.subr.mxu0 0.0
    %1219 = vmatpush1.msra.mxu0 0.0
    %1220 = vmatprep.subr.mxu0 0.0
    %1221 = vmatpush1.msra.mxu0 0.0
    %1222 = vmatprep.subr.mxu0 0.0
    %1223 = vmatpush1.msra.mxu0 0.0
    %1224 = vmatprep.subr.mxu0 0.0
    %1225 = vmatpush1.msra.mxu0 0.0
    %1226 = vmatprep.subr.mxu0 0.0
    %1227 = vmatpush1.msra.mxu0 0.0
    %1228 = vmatprep.mubr.f32.mxu0 0.0
    %1229 = vmatmul.mubr.f32.gmra.mrb[0].mxu0 %v1162
    %v1230 = vpop.f32.mrb[0].mxu0
    %v1231 = vadd.f32 %v1159, %v1230
    %v1232 = vpop.f32.mrb[0].mxu0
    %v1233 = vadd.f32 %v1159, %v1232
    %1234 = vdwg.mxu0
    %v1235 = vtanh.pop %v1231
    %v1236 = vtanh.pop %v1233
    %v1237 = vmul.f32 %v1235, 1.442695
    %v1238 = vpow.pop %v1237
    %v1239 = vmul.f32 %v1236, 1.442695
    %v1240 = vpow.pop %v1239
    %v1243 = vcombine.low %v1238, %v1240
    %v1245 = vunpack.c.l.s4 1983009808
    %v1246 = vunpack.c.0.s8 %v1245
    %v1247 = vlaneseq
    %v1248 = vshrl.u32 %v1247, 7
    %v1249 = vsub.s32 %v1246, %v1248
    %v1250 = vrot.slane %v1243, %v1249
    %v1252 = vmul.f32 %v851, %v1250
    %v1255 = vcombine.low %v1231, %v1233
    %v1257 = vunpack.c.l.s4 1983009808
    %v1258 = vunpack.c.0.s8 %v1257
    %v1259 = vlaneseq
    %v1260 = vshrl.u32 %v1259, 7
    %v1261 = vsub.s32 %v1258, %v1260
    %v1262 = vrot.slane %v1255, %v1261
    %v1263 = vcombine.high %v1262, %v1262
    %v1265 = vadd.f32 %v1252, %v1263
    %v1266 = vadd.f32 %v852, %v1235
    %v1267 = vadd.f32 %v853, %v1236
    %s1268 = scalar_lea.vmem %s0, 96
    %v1269 = vld [vmem:[%s1268] sm:$0xff]
    %v1270 = vld [vmem:[%s1268 + $0x8] sm:$0xff]
    %v1271 = vld [vmem:[%s1268 + $0x10] sm:$0xff]
    %v1272 = vld [vmem:[%s1268 + $0x18] sm:$0xff]
    %1274 = vset.pattern.permute.xlu0 0
    %1275 = vperm.xlu0 %1274, %v1269
    %v1276 = vpop.permute.xlu0 %1275
    %1279 = vset.pattern.permute.xlu0 0
    %1280 = vperm.xlu0 %1279, %v1270
    %v1281 = vpop.permute.xlu0 %1280
    %1284 = vset.pattern.permute.xlu0 0
    %1285 = vperm.xlu0 %1284, %v1271
    %v1286 = vpop.permute.xlu0 %1285
    %1289 = vset.pattern.permute.xlu0 0
    %1290 = vperm.xlu0 %1289, %v1272
    %v1291 = vpop.permute.xlu0 %1290
    %v1294 = vlaneseq
    %v1295 = vshrl.u32 %v1294, 7
    %v1296 = vsub.s32 0, %v1295
    %v1297 = vrot.slane %v1265, %v1296
    %v1298 = vlaneseq
    %v1299 = vshrl.u32 %v1298, 7
    %v1300 = vsub.s32 2, %v1299
    %v1301 = vrot.slane %v1265, %v1300
    %v1304 = vlaneseq
    %v1305 = vshrl.u32 %v1304, 7
    %v1306 = vsub.s32 0, %v1305
    %v1307 = vrot.slane %v1297, %v1306
    %v1308 = vlaneseq
    %v1309 = vshrl.u32 %v1308, 7
    %v1310 = vsub.s32 0, %v1309
    %v1311 = vrot.slane %v1301, %v1310
    %v1312 = vmul.f32 %v1276, %v1307
    %v1313 = vmul.f32 %v1276, %v1311
    %v1314 = vmul.f32 %v1281, %v1307
    %v1315 = vmul.f32 %v1281, %v1311
    %v1316 = vmul.f32 %v1286, %v1307
    %v1317 = vmul.f32 %v1286, %v1311
    %v1318 = vmul.f32 %v1291, %v1307
    %v1319 = vmul.f32 %v1291, %v1311
    %1320 = vset.pattern.permute.xlu0 1
    %1321 = vperm.xlu0 %1320, %v1269
    %v1322 = vpop.permute.xlu0 %1321
    %1324 = vset.pattern.permute.xlu0 1
    %1325 = vperm.xlu0 %1324, %v1270
    %v1326 = vpop.permute.xlu0 %1325
    %1328 = vset.pattern.permute.xlu0 1
    %1329 = vperm.xlu0 %1328, %v1271
    %v1330 = vpop.permute.xlu0 %1329
    %1332 = vset.pattern.permute.xlu0 1
    %1333 = vperm.xlu0 %1332, %v1272
    %v1334 = vpop.permute.xlu0 %1333
    %v1336 = vlaneseq
    %v1337 = vshrl.u32 %v1336, 7
    %v1338 = vsub.s32 1, %v1337
    %v1339 = vrot.slane %v1265, %v1338
    %v1340 = vlaneseq
    %v1341 = vshrl.u32 %v1340, 7
    %v1342 = vsub.s32 3, %v1341
    %v1343 = vrot.slane %v1265, %v1342
    %v1346 = vlaneseq
    %v1347 = vshrl.u32 %v1346, 7
    %v1348 = vsub.s32 1, %v1347
    %v1349 = vrot.slane %v1339, %v1348
    %v1350 = vlaneseq
    %v1351 = vshrl.u32 %v1350, 7
    %v1352 = vsub.s32 1, %v1351
    %v1353 = vrot.slane %v1343, %v1352
    %v1354 = vmul.f32 %v1322, %v1349
    %v1355 = vmul.f32 %v1322, %v1353
    %v1356 = vmul.f32 %v1326, %v1349
    %v1357 = vmul.f32 %v1326, %v1353
    %v1358 = vmul.f32 %v1330, %v1349
    %v1359 = vmul.f32 %v1330, %v1353
    %v1360 = vmul.f32 %v1334, %v1349
    %v1361 = vmul.f32 %v1334, %v1353
    %v1362 = vadd.f32 %v1312, %v1354
    %v1363 = vadd.f32 %v1313, %v1355
    %v1364 = vadd.f32 %v1314, %v1356
    %v1365 = vadd.f32 %v1315, %v1357
    %v1366 = vadd.f32 %v1316, %v1358
    %v1367 = vadd.f32 %v1317, %v1359
    %v1368 = vadd.f32 %v1318, %v1360
    %v1369 = vadd.f32 %v1319, %v1361
    %s1370 = scalar_lea.vmem %s1, 96
    %v1371 = vld [vmem:[%s1370] sm:$0xff]
    %v1372 = vld [vmem:[%s1370 + $0x8] sm:$0xff]
    %v1373 = vld [vmem:[%s1370 + $0x10] sm:$0xff]
    %v1374 = vld [vmem:[%s1370 + $0x18] sm:$0xff]
    %1376 = vset.pattern.permute.xlu0 0
    %1377 = vperm.xlu0 %1376, %v1371
    %v1378 = vpop.permute.xlu0 %1377
    %1381 = vset.pattern.permute.xlu0 0
    %1382 = vperm.xlu0 %1381, %v1372
    %v1383 = vpop.permute.xlu0 %1382
    %1386 = vset.pattern.permute.xlu0 0
    %1387 = vperm.xlu0 %1386, %v1373
    %v1388 = vpop.permute.xlu0 %1387
    %1391 = vset.pattern.permute.xlu0 0
    %1392 = vperm.xlu0 %1391, %v1374
    %v1393 = vpop.permute.xlu0 %1392
    %v1395 = vadd.f32 %v1362, %v1378
    %v1396 = vadd.f32 %v1363, %v1378
    %v1397 = vadd.f32 %v1364, %v1383
    %v1398 = vadd.f32 %v1365, %v1383
    %v1399 = vadd.f32 %v1366, %v1388
    %v1400 = vadd.f32 %v1367, %v1388
    %v1401 = vadd.f32 %v1368, %v1393
    %v1402 = vadd.f32 %v1369, %v1393
    %v1403 = vmul.f32 %v1395, 0.01
    %v1404 = vmul.f32 %v1396, 0.01
    %v1405 = vmul.f32 %v1397, 0.01
    %v1406 = vmul.f32 %v1398, 0.01
    %v1407 = vmul.f32 %v1399, 0.01
    %v1408 = vmul.f32 %v1400, 0.01
    %v1409 = vmul.f32 %v1401, 0.01
    %v1410 = vmul.f32 %v1402, 0.01
    %v1411 = vmax.f32 %v1395, %v1403
    %v1412 = vmax.f32 %v1396, %v1404
    %v1413 = vmax.f32 %v1397, %v1405
    %v1414 = vmax.f32 %v1398, %v1406
    %v1415 = vmax.f32 %v1399, %v1407
    %v1416 = vmax.f32 %v1400, %v1408
    %v1417 = vmax.f32 %v1401, %v1409
    %v1418 = vmax.f32 %v1402, %v1410
    %s1419 = scalar_lea.vmem %s2, 96
    %v1420 = vld [vmem:[%s1419] sm:$0xff]
    %v1421 = vld [vmem:[%s1419 + $0x8] sm:$0xff]
    %v1422 = vld [vmem:[%s1419 + $0x10] sm:$0xff]
    %v1423 = vld [vmem:[%s1419 + $0x18] sm:$0xff]
    %s1424 = scalar_lea.vmem %s3, 96
    %v1425 = vld [vmem:[%s1424] sm:$0xff]
    %v1426 = vld [vmem:[%s1424 + $0x8] sm:$0xff]
    %v1427 = vld [vmem:[%s1424 + $0x10] sm:$0xff]
    %v1428 = vld [vmem:[%s1424 + $0x18] sm:$0xff]
    %1430 = vset.pattern.permute.xlu0 0
    %1431 = vperm.xlu0 %1430, %v1425
    %v1432 = vpop.permute.xlu0 %1431
    %1435 = vset.pattern.permute.xlu0 0
    %1436 = vperm.xlu0 %1435, %v1426
    %v1437 = vpop.permute.xlu0 %1436
    %1440 = vset.pattern.permute.xlu0 0
    %1441 = vperm.xlu0 %1440, %v1427
    %v1442 = vpop.permute.xlu0 %1441
    %1445 = vset.pattern.permute.xlu0 0
    %1446 = vperm.xlu0 %1445, %v1428
    %v1447 = vpop.permute.xlu0 %1446
    %v1450 = vsel %vm208, %v1420, 0
    %v1453 = vsel %vm208, %v1421, 0
    %v1456 = vsel %vm208, %v1422, 0
    %v1459 = vsel %vm208, %v1423, 0
    %1461 = vmatprep.subr.mxu0 %v1412
    %1462 = vmatpush1.msra.mxu0 %v1411
    %1463 = vmatprep.subr.mxu0 %v1414
    %1464 = vmatpush1.msra.mxu0 %v1413
    %1465 = vmatprep.subr.mxu0 %v1416
    %1466 = vmatpush1.msra.mxu0 %v1415
    %1467 = vmatprep.subr.mxu0 %v1418
    %1468 = vmatpush1.msra.mxu0 %v1417
    %1469 = vmatprep.subr.mxu0 0.0
    %1470 = vmatpush1.msra.mxu0 0.0
    %1471 = vmatprep.subr.mxu0 0.0
    %1472 = vmatpush1.msra.mxu0 0.0
    %1473 = vmatprep.subr.mxu0 0.0
    %1474 = vmatpush1.msra.mxu0 0.0
    %1475 = vmatprep.subr.mxu0 0.0
    %1476 = vmatpush1.msra.mxu0 0.0
    %1477 = vmatprep.subr.mxu0 0.0
    %1478 = vmatpush1.msra.mxu0 0.0
    %1479 = vmatprep.subr.mxu0 0.0
    %1480 = vmatpush1.msra.mxu0 0.0
    %1481 = vmatprep.subr.mxu0 0.0
    %1482 = vmatpush1.msra.mxu0 0.0
    %1483 = vmatprep.subr.mxu0 0.0
    %1484 = vmatpush1.msra.mxu0 0.0
    %1485 = vmatprep.subr.mxu0 0.0
    %1486 = vmatpush1.msra.mxu0 0.0
    %1487 = vmatprep.subr.mxu0 0.0
    %1488 = vmatpush1.msra.mxu0 0.0
    %1489 = vmatprep.subr.mxu0 0.0
    %1490 = vmatpush1.msra.mxu0 0.0
    %1491 = vmatprep.subr.mxu0 0.0
    %1492 = vmatpush1.msra.mxu0 0.0
    %1493 = vmatprep.subr.mxu0 0.0
    %1494 = vmatpush1.msra.mxu0 0.0
    %1495 = vmatprep.subr.mxu0 0.0
    %1496 = vmatpush1.msra.mxu0 0.0
    %1497 = vmatprep.subr.mxu0 0.0
    %1498 = vmatpush1.msra.mxu0 0.0
    %1499 = vmatprep.subr.mxu0 0.0
    %1500 = vmatpush1.msra.mxu0 0.0
    %1501 = vmatprep.subr.mxu0 0.0
    %1502 = vmatpush1.msra.mxu0 0.0
    %1503 = vmatprep.subr.mxu0 0.0
    %1504 = vmatpush1.msra.mxu0 0.0
    %1505 = vmatprep.subr.mxu0 0.0
    %1506 = vmatpush1.msra.mxu0 0.0
    %1507 = vmatprep.subr.mxu0 0.0
    %1508 = vmatpush1.msra.mxu0 0.0
    %1509 = vmatprep.subr.mxu0 0.0
    %1510 = vmatpush1.msra.mxu0 0.0
    %1511 = vmatprep.subr.mxu0 0.0
    %1512 = vmatpush1.msra.mxu0 0.0
    %1513 = vmatprep.subr.mxu0 0.0
    %1514 = vmatpush1.msra.mxu0 0.0
    %1515 = vmatprep.subr.mxu0 0.0
    %1516 = vmatpush1.msra.mxu0 0.0
    %1517 = vmatprep.subr.mxu0 0.0
    %1518 = vmatpush1.msra.mxu0 0.0
    %1519 = vmatprep.subr.mxu0 0.0
    %1520 = vmatpush1.msra.mxu0 0.0
    %1521 = vmatprep.subr.mxu0 0.0
    %1522 = vmatpush1.msra.mxu0 0.0
    %1523 = vmatprep.subr.mxu0 0.0
    %1524 = vmatpush1.msra.mxu0 0.0
    %1525 = vmatprep.mubr.f32.mxu0 0.0
    %1526 = vmatmul.mubr.f32.gmra.mrb[0].mxu0 %v1450
    %v1527 = vpop.f32.mrb[0].mxu0
    %v1528 = vadd.f32 %v1432, %v1527
    %v1529 = vpop.f32.mrb[0].mxu0
    %v1530 = vadd.f32 %v1432, %v1529
    %1531 = vmatprep.mubr.f32.mxu0 0.0
    %1532 = vmatmul.mubr.f32.gmra.mrb[0].mxu0 %v1453
    %v1533 = vpop.f32.mrb[0].mxu0
    %v1534 = vadd.f32 %v1437, %v1533
    %v1535 = vpop.f32.mrb[0].mxu0
    %v1536 = vadd.f32 %v1437, %v1535
    %1537 = vmatprep.mubr.f32.mxu0 0.0
    %1538 = vmatmul.mubr.f32.gmra.mrb[0].mxu0 %v1456
    %v1539 = vpop.f32.mrb[0].mxu0
    %v1540 = vadd.f32 %v1442, %v1539
    %v1541 = vpop.f32.mrb[0].mxu0
    %v1542 = vadd.f32 %v1442, %v1541
    %1543 = vmatprep.mubr.f32.mxu0 0.0
    %1544 = vmatmul.mubr.f32.gmra.mrb[0].mxu0 %v1459
    %v1545 = vpop.f32.mrb[0].mxu0
    %v1546 = vadd.f32 %v1447, %v1545
    %v1547 = vpop.f32.mrb[0].mxu0
    %v1548 = vadd.f32 %v1447, %v1547
    %1549 = vdwg.mxu0
    %v1550 = vmul.f32 %v1528, 0.01
    %v1551 = vmul.f32 %v1530, 0.01
    %v1552 = vmul.f32 %v1534, 0.01
    %v1553 = vmul.f32 %v1536, 0.01
    %v1554 = vmul.f32 %v1540, 0.01
    %v1555 = vmul.f32 %v1542, 0.01
    %v1556 = vmul.f32 %v1546, 0.01
    %v1557 = vmul.f32 %v1548, 0.01
    %v1558 = vmax.f32 %v1528, %v1550
    %v1559 = vmax.f32 %v1530, %v1551
    %v1560 = vmax.f32 %v1534, %v1552
    %v1561 = vmax.f32 %v1536, %v1553
    %v1562 = vmax.f32 %v1540, %v1554
    %v1563 = vmax.f32 %v1542, %v1555
    %v1564 = vmax.f32 %v1546, %v1556
    %v1565 = vmax.f32 %v1548, %v1557
    %s1566 = scalar_lea.vmem %s4, 12
    %v1567 = vld [vmem:[%s1566] sm:$0xf]
    %s1568 = scalar_lea.vmem %s5, 12
    %v1569 = vld [vmem:[%s1568] sm:$0xf]
    %1571 = vset.pattern.permute.xlu0 0
    %1572 = vperm.xlu0 %1571, %v1569
    %v1573 = vpop.permute.xlu0 %1572
    %v1576 = vsel %vm208, %v1567, 0
    %1578 = vmatprep.subr.mxu0 %v1559
    %1579 = vmatpush1.msra.mxu0 %v1558
    %1580 = vmatprep.subr.mxu0 %v1561
    %1581 = vmatpush1.msra.mxu0 %v1560
    %1582 = vmatprep.subr.mxu0 %v1563
    %1583 = vmatpush1.msra.mxu0 %v1562
    %1584 = vmatprep.subr.mxu0 %v1565
    %1585 = vmatpush1.msra.mxu0 %v1564
    %1586 = vmatprep.subr.mxu0 0.0
    %1587 = vmatpush1.msra.mxu0 0.0
    %1588 = vmatprep.subr.mxu0 0.0
    %1589 = vmatpush1.msra.mxu0 0.0
    %1590 = vmatprep.subr.mxu0 0.0
    %1591 = vmatpush1.msra.mxu0 0.0
    %1592 = vmatprep.subr.mxu0 0.0
    %1593 = vmatpush1.msra.mxu0 0.0
    %1594 = vmatprep.subr.mxu0 0.0
    %1595 = vmatpush1.msra.mxu0 0.0
    %1596 = vmatprep.subr.mxu0 0.0
    %1597 = vmatpush1.msra.mxu0 0.0
    %1598 = vmatprep.subr.mxu0 0.0
    %1599 = vmatpush1.msra.mxu0 0.0
    %1600 = vmatprep.subr.mxu0 0.0
    %1601 = vmatpush1.msra.mxu0 0.0
    %1602 = vmatprep.subr.mxu0 0.0
    %1603 = vmatpush1.msra.mxu0 0.0
    %1604 = vmatprep.subr.mxu0 0.0
    %1605 = vmatpush1.msra.mxu0 0.0
    %1606 = vmatprep.subr.mxu0 0.0
    %1607 = vmatpush1.msra.mxu0 0.0
    %1608 = vmatprep.subr.mxu0 0.0
    %1609 = vmatpush1.msra.mxu0 0.0
    %1610 = vmatprep.subr.mxu0 0.0
    %1611 = vmatpush1.msra.mxu0 0.0
    %1612 = vmatprep.subr.mxu0 0.0
    %1613 = vmatpush1.msra.mxu0 0.0
    %1614 = vmatprep.subr.mxu0 0.0
    %1615 = vmatpush1.msra.mxu0 0.0
    %1616 = vmatprep.subr.mxu0 0.0
    %1617 = vmatpush1.msra.mxu0 0.0
    %1618 = vmatprep.subr.mxu0 0.0
    %1619 = vmatpush1.msra.mxu0 0.0
    %1620 = vmatprep.subr.mxu0 0.0
    %1621 = vmatpush1.msra.mxu0 0.0
    %1622 = vmatprep.subr.mxu0 0.0
    %1623 = vmatpush1.msra.mxu0 0.0
    %1624 = vmatprep.subr.mxu0 0.0
    %1625 = vmatpush1.msra.mxu0 0.0
    %1626 = vmatprep.subr.mxu0 0.0
    %1627 = vmatpush1.msra.mxu0 0.0
    %1628 = vmatprep.subr.mxu0 0.0
    %1629 = vmatpush1.msra.mxu0 0.0
    %1630 = vmatprep.subr.mxu0 0.0
    %1631 = vmatpush1.msra.mxu0 0.0
    %1632 = vmatprep.subr.mxu0 0.0
    %1633 = vmatpush1.msra.mxu0 0.0
    %1634 = vmatprep.subr.mxu0 0.0
    %1635 = vmatpush1.msra.mxu0 0.0
    %1636 = vmatprep.subr.mxu0 0.0
    %1637 = vmatpush1.msra.mxu0 0.0
    %1638 = vmatprep.subr.mxu0 0.0
    %1639 = vmatpush1.msra.mxu0 0.0
    %1640 = vmatprep.subr.mxu0 0.0
    %1641 = vmatpush1.msra.mxu0 0.0
    %1642 = vmatprep.mubr.f32.mxu0 0.0
    %1643 = vmatmul.mubr.f32.gmra.mrb[0].mxu0 %v1576
    %v1644 = vpop.f32.mrb[0].mxu0
    %v1645 = vadd.f32 %v1573, %v1644
    %v1646 = vpop.f32.mrb[0].mxu0
    %v1647 = vadd.f32 %v1573, %v1646
    %1648 = vdwg.mxu0
    %v1649 = vtanh.pop %v1645
    %v1650 = vtanh.pop %v1647
    %v1651 = vmul.f32 %v1649, 1.442695
    %v1652 = vpow.pop %v1651
    %v1653 = vmul.f32 %v1650, 1.442695
    %v1654 = vpow.pop %v1653
    %v1657 = vcombine.low %v1652, %v1654
    %v1659 = vunpack.c.l.s4 1983009808
    %v1660 = vunpack.c.0.s8 %v1659
    %v1661 = vlaneseq
    %v1662 = vshrl.u32 %v1661, 7
    %v1663 = vsub.s32 %v1660, %v1662
    %v1664 = vrot.slane %v1657, %v1663
    %v1666 = vmul.f32 %v1265, %v1664
    %v1669 = vcombine.low %v1645, %v1647
    %v1671 = vunpack.c.l.s4 1983009808
    %v1672 = vunpack.c.0.s8 %v1671
    %v1673 = vlaneseq
    %v1674 = vshrl.u32 %v1673, 7
    %v1675 = vsub.s32 %v1672, %v1674
    %v1676 = vrot.slane %v1669, %v1675
    %v1677 = vcombine.high %v1676, %v1676
    %v1679 = vadd.f32 %v1666, %v1677
    %v1680 = vadd.f32 %v1266, %v1649
    %v1681 = vadd.f32 %v1267, %v1650
    %1682 = vst [vmem:[#allocation2] sm:$0xf] %v1679
    %vm1683 = vcmask 1041408
    %v1684 = vsel %vm1683, %v1680, 0.0
    %v1685 = vrot.slane %v1684, 4
    %v1686 = vadd.f32 %v1684, %v1685
    %v1687 = vrot.slane %v1686, 2
    %v1688 = vadd.f32 %v1686, %v1687
    %v1689 = vrot.slane %v1688, 1
    %v1690 = vadd.f32 %v1688, %v1689
    %v1691 = vsel %vm1683, %v1681, 0.0
    %v1692 = vrot.slane %v1691, 4
    %v1693 = vadd.f32 %v1691, %v1692
    %v1694 = vrot.slane %v1693, 2
    %v1695 = vadd.f32 %v1693, %v1694
    %v1696 = vrot.slane %v1695, 1
    %v1697 = vadd.f32 %v1695, %v1696
    %v1700 = vcombine.low %v1690, %v1697
    %v1702 = vunpack.c.l.s4 1966171168
    %v1703 = vunpack.c.0.s8 %v1702
    %v1704 = vlaneseq
    %v1705 = vshrl.u32 %v1704, 7
    %v1706 = vsub.s32 %v1703, %v1705
    %v1707 = vrot.slane %v1700, %v1706
    %v1709 = vunpack.c.l.s4 1966171168
    %v1710 = vunpack.c.0.s8 %v1709
    %v1711 = vlaneseq
    %v1712 = vshrl.u32 %v1711, 7
    %v1713 = vsub.s32 %v1710, %v1712
    %v1714 = vrot.slane %v1707, %v1713
    %v1716 = vlaneseq
    %vm1717 = vcmp.ge.s32.totalorder %v1716, 0
    %vm1718 = vcmp.lt.s32.totalorder %v1716, 256
    %vm1719 = vmand %vm1717, %vm1718
    %1720 = vst.msk [vmem:[#allocation4] sm:$0x3] %vm1719, %v1714
    // Predicated region
    $region30: #{tpu_custom_call.1} parent=1 // pred_check
      _
    $region31: #{tpu_custom_call.1} parent=1 // pred_check_branch
      %1722 = sbr.rel (0) target = $region33
    $region32: #{tpu_custom_call.1} parent=1 // pred_region
      %s1724 = ssub.s32 64, 64
      %1725 = vsyncadd [#allocation3], %s1724
      %s1727 = sshll.u32 [#allocation2], 4
      %s1728 = int_to_ptr.vmem [resolvable:$true] %s1727
      %1730 = dma.vmem_to_hbm [thread:$0]  %s1728, 64, %s7, [#allocation3]
    $region33: #{tpu_custom_call.1} parent=1 // pred_fallthru
      _
    // Predicated region
    $region34: #{tpu_custom_call.1} parent=1 // pred_check
      _
    $region35: #{tpu_custom_call.1} parent=1 // pred_check_branch
      %1732 = sbr.rel (0) target = $region37
    $region36: #{tpu_custom_call.1} parent=1 // pred_region
      %s1734 = ssub.s32 32, 32
      %1735 = vsyncadd [#allocation5], %s1734
      %s1737 = sshll.u32 [#allocation4], 4
      %s1738 = int_to_ptr.vmem [resolvable:$true] %s1737
      %1740 = dma.vmem_to_hbm [thread:$0]  %s1738, 32, %s8, [#allocation5]
    $region37: #{tpu_custom_call.1} parent=1 // pred_fallthru
      _
    // Predicated region
    $region38: #{tpu_custom_call.1} parent=1 // pred_check
      _
    $region39: #{tpu_custom_call.1} parent=1 // pred_check_branch
      %1742 = sbr.rel (0) target = $region41
    $region40: #{tpu_custom_call.1} parent=1 // pred_region
      %1743 = dma.done [#allocation3], 64
    $region41: #{tpu_custom_call.1} parent=1 // pred_fallthru
      _
    // Predicated region
    $region42: #{tpu_custom_call.1} parent=1 // pred_check
      _
    $region43: #{tpu_custom_call.1} parent=1 // pred_check_branch
      %1745 = sbr.rel (0) target = $region45
    $region44: #{tpu_custom_call.1} parent=1 // pred_region
      %1746 = dma.done [#allocation5], 32
    $region45: #{tpu_custom_call.1} parent=1 // pred_fallthru
      _
    %1747 = vsyncpa [#allocation3], 1
    %1748 = vsyncpa [#allocation5], 1

</llo_original>
